<compile_context>
chip_gen: v5e
topology: v5e:2x2
jax: 0.10.0
libtpu: 0.0.40
codegen_flags: <defaults>
</compile_context>

<pallas_src>
import functools

import jax
import jax.numpy as jnp
from jax import lax
from jax.experimental import pallas as pl
from jax.experimental.pallas import tpu as pltpu

LEAKY_SLOPE = 0.01          # torch.nn.LeakyReLU default negative_slope
_STATIC_UNROLL_MAX = 8      # layers beyond layer-0 handled by static unroll up to this


def _round_up(x, m):
    return (x + m - 1) // m * m


def _pad2(a, rows, cols):
    return jnp.pad(a, ((0, rows - a.shape[0]), (0, cols - a.shape[1])))


# ----------------------------------------------------------------------------
# Fused Pallas kernel: all liquid blocks + output Linear in one body.
# ----------------------------------------------------------------------------
def _fused_liquid_kernel(x_ref, w1f_ref, w1r_ref, b1_ref, w2_ref, b2_ref,
                         ow_ref, ob_ref, o_ref, *, num_layers):
    cd = w2_ref.dtype  # MXU input dtype (f32 or bf16); accumulation is always f32

    def liquid_block(x_cd, w1, b1, w2, b2):
        h = jnp.dot(x_cd, w1, preferred_element_type=jnp.float32) + b1
        h = jnp.maximum(h, LEAKY_SLOPE * h)   # LeakyReLU: mul + max (2 VPU ops)
        return jnp.dot(h.astype(cd), w2, preferred_element_type=jnp.float32) + b2

    # Layer 0 (input width P_in may differ from hidden width P_h).
    x = liquid_block(x_ref[...].astype(cd), w1f_ref[...], b1_ref[0],
                     w2_ref[0], b2_ref[0])

    # Layers 1 .. L-1 (all P_h x P_h, weights resident in VMEM).
    if num_layers - 1 <= _STATIC_UNROLL_MAX:
        for l in range(1, num_layers):
            x = liquid_block(x.astype(cd), w1r_ref[l - 1], b1_ref[l],
                             w2_ref[l], b2_ref[l])
    else:
        def body(l, x_carry):
            return liquid_block(x_carry.astype(cd), w1r_ref[l - 1], b1_ref[l],
                                w2_ref[l], b2_ref[l])
        x = lax.fori_loop(1, num_layers, body, x)

    y = jnp.dot(x.astype(cd), ow_ref[...], preferred_element_type=jnp.float32) + ob_ref[...]
    o_ref[...] = y.astype(o_ref.dtype)


# ----------------------------------------------------------------------------
# Parameter construction (PyTorch-Linear-style, unpadded) + packing for the kernel
# ----------------------------------------------------------------------------
def init_params(key, input_size, hidden_size, num_layers, output_size,
                dtype=jnp.float32):
    """Deterministic synthetic init (PyTorch-Linear-style uniform bounds).

    Weights stored as (in_features, out_features) so the kernel hot path is x @ W + b.
    """
    params = {"layers": []}
    in_f = input_size
    for _ in range(num_layers):
        key, k1, k2, k3, k4 = jax.random.split(key, 5)
        bound1 = 1.0 / jnp.sqrt(in_f)
        bound2 = 1.0 / jnp.sqrt(hidden_size)
        w1 = jax.random.uniform(k1, (in_f, hidden_size), dtype, -bound1, bound1)
        b1 = jax.random.uniform(k2, (1, hidden_size), dtype, -bound1, bound1)
        w2 = jax.random.uniform(k3, (hidden_size, hidden_size), dtype, -bound2, bound2)
        b2 = jax.random.uniform(k4, (1, hidden_size), dtype, -bound2, bound2)
        params["layers"].append((w1, b1, w2, b2))
        in_f = hidden_size
    key, k1, k2 = jax.random.split(key, 3)
    bound = 1.0 / jnp.sqrt(hidden_size)
    params["out_w"] = jax.random.uniform(k1, (hidden_size, output_size), dtype, -bound, bound)
    params["out_b"] = jax.random.uniform(k2, (1, output_size), dtype, -bound, bound)
    return params


def pack_params(params, input_size, hidden_size, output_size,
                compute_dtype=jnp.float32):
    """Zero-pad feature dims to multiples of 128 (lane-dense) and stack per-layer weights.

    Only layer-0 W1 carries the input width; all other weights pad to P_h only.
    Weights are cast to `compute_dtype` (MXU inputs); biases stay f32.
    """
    L = len(params["layers"])
    P_in = _round_up(input_size, 128)
    P_h = _round_up(hidden_size, 128)
    Op = _round_up(output_size, 128)

    layers = params["layers"]
    w1_first = _pad2(layers[0][0].astype(jnp.float32), P_in, P_h).astype(compute_dtype)
    w1_rest = [_pad2(w1.astype(jnp.float32), P_h, P_h).astype(compute_dtype)
               for (w1, _, _, _) in layers[1:]]
    if not w1_rest:  # num_layers == 1: dummy (never read by the kernel)
        w1_rest = [jnp.zeros((P_h, P_h), compute_dtype)]

    b1s = [_pad2(b1.astype(jnp.float32), 1, P_h) for (_, b1, _, _) in layers]
    w2s = [_pad2(w2.astype(jnp.float32), P_h, P_h).astype(compute_dtype)
           for (_, _, w2, _) in layers]
    b2s = [_pad2(b2.astype(jnp.float32), 1, P_h) for (_, _, _, b2) in layers]

    return {
        "num_layers": L,
        "w1_first": w1_first,                          # (P_in, P_h)  compute_dtype
        "w1_rest": jnp.stack(w1_rest),                 # (max(L-1,1), P_h, P_h)
        "b1": jnp.stack(b1s),                          # (L, 1, P_h)  f32
        "w2": jnp.stack(w2s),                          # (L, P_h, P_h) compute_dtype
        "b2": jnp.stack(b2s),                          # (L, 1, P_h)  f32
        "out_w": _pad2(params["out_w"].astype(jnp.float32), P_h, Op).astype(compute_dtype),
        "out_b": _pad2(params["out_b"].astype(jnp.float32), 1, Op),   # (1, Op) f32
    }


# ----------------------------------------------------------------------------
# Forward pass: one fused pallas_call
# ----------------------------------------------------------------------------
def liquid_nn_forward(packed, x, output_size, *, max_batch_tile=256):
    # NOTE: max_batch_tile=256 targets v6e/v7x (256-wide MXU); consider 128 on v5e.
    batch, in_f = x.shape
    L = packed["num_layers"]
    P_in, P_h = packed["w1_first"].shape
    Lr = packed["w1_rest"].shape[0]
    Op = packed["out_w"].shape[1]
    cd = packed["w1_first"].dtype
    cd_bytes = jnp.dtype(cd).itemsize

    # --- batch tiling: pick bt as a divisor of the sublane-padded batch (no over-pad)
    Bp = _round_up(batch, 8)
    bt = min(Bp, max_batch_tile)
    while Bp % bt != 0:
        bt -= 8
    # Large single-step grids: split into 2 steps so a 2-TC chip (v7x) can shard
    # the 'parallel' batch axis. No effect on the toy batch (gate on size).
    if bt == Bp and Bp >= 256 and (Bp // 2) % 8 == 0:
        bt = Bp // 2
    grid = (Bp // bt,)

    xp = jnp.pad(x.astype(jnp.float32), ((0, Bp - batch), (0, P_in - in_f))).astype(cd)

    # --- cost estimate (advisory)
    flops = 2 * Bp * (P_in * P_h + (2 * L - 1) * P_h * P_h + P_h * Op)
    weight_elems_cd = P_in * P_h + (Lr + L) * P_h * P_h + P_h * Op
    bias_elems_f32 = 2 * L * P_h + Op
    bytes_accessed = (Bp * P_in * cd_bytes + Bp * Op * 4
                      + weight_elems_cd * cd_bytes + bias_elems_f32 * 4)
    cost = pl.CostEstimate(flops=flops, transcendentals=0,
                           bytes_accessed=bytes_accessed)

    kernel = functools.partial(_fused_liquid_kernel, num_layers=L)

    def run(single_buffer):
        # VMEM budget from actual residency (weights x buffer count + I/O tiles).
        wbufs = 1 if single_buffer else 2
        resident = (wbufs * (weight_elems_cd * cd_bytes + bias_elems_f32 * 4)
                    + 2 * bt * P_in * cd_bytes      # double-buffered input tile
                    + 2 * bt * Op * 4)              # double-buffered output tile
        act_headroom = 8 * bt * P_h * 4             # in-flight f32 activations / spill
        vmem_limit = int(min(max(2 * resident + act_headroom + (2 << 20), 8 << 20),
                             64 << 20))

        def wspec(shape):
            # Grid-invariant operand: constant index map (stays resident across
            # batch tiles); single DMA buffer when supported.
            imap = (lambda i: (0, 0)) if len(shape) == 2 else (lambda i: (0, 0, 0))
            kwargs = {}
            if single_buffer:
                kwargs["pipeline_mode"] = pl.Buffered(buffer_count=1)
            return pl.BlockSpec(shape, imap, **kwargs)

        return pl.pallas_call(
            kernel,
            out_shape=jax.ShapeDtypeStruct((Bp, Op), jnp.float32),
            grid=grid,
            in_specs=[
                pl.BlockSpec((bt, P_in), lambda i: (i, 0)),   # x (batch-tiled)
                wspec((P_in, P_h)),                           # layer-0 W1
                wspec((Lr, P_h, P_h)),                        # stacked W1, layers 1..L-1
                wspec((L, 1, P_h)),                           # stacked b1
                wspec((L, P_h, P_h)),                         # stacked W2
                wspec((L, 1, P_h)),                           # stacked b2
                wspec((P_h, Op)),                             # output-layer weight
                wspec((1, Op)),                               # output-layer bias
            ],
            out_specs=pl.BlockSpec((bt, Op), lambda i: (i, 0)),
            compiler_params=pltpu.CompilerParams(
                dimension_semantics=("parallel",),
                vmem_limit_bytes=vmem_limit,
            ),
            cost_estimate=cost,
        )(xp, packed["w1_first"], packed["w1_rest"], packed["b1"],
          packed["w2"], packed["b2"], packed["out_w"], packed["out_b"])

    try:
        out = run(single_buffer=True)
    except Exception:
        # Fallback for jax versions without BlockSpec.pipeline_mode / Buffered(1);
        # identical math, default (double-buffered) weight specs.
        out = run(single_buffer=False)

    return out[:batch, :output_size]


# ----------------------------------------------------------------------------
# Pure-JAX reference (same math, highest matmul precision)
# ----------------------------------------------------------------------------
def liquid_nn_reference(params, x):
    prec = lax.Precision.HIGHEST
    for (w1, b1, w2, b2) in params["layers"]:
        h = jnp.dot(x, w1, precision=prec) + b1
        h = jnp.where(h > 0, h, LEAKY_SLOPE * h)
        x = jnp.dot(h, w2, precision=prec) + b2
    return jnp.dot(x, params["out_w"], precision=prec) + params["out_b"]


# ----------------------------------------------------------------------------
if __name__ == "__main__":
    batch = 8
    input_size = 16
    hidden_size = 32
    num_layers = 3
    output_size = 10

    key = jax.random.PRNGKey(0)
    key, xk = jax.random.split(key)
    x = jax.random.normal(xk, (batch, input_size), dtype=jnp.float32)

    params = init_params(key, input_size, hidden_size, num_layers, output_size)
    ref = liquid_nn_reference(params, x)

    # f32 compute path: exactness check against the pure-JAX reference.
    packed_f32 = pack_params(params, input_size, hidden_size, output_size,
                             compute_dtype=jnp.float32)
    out_f32 = jax.block_until_ready(liquid_nn_forward(packed_f32, x, output_size))
    assert out_f32.shape == (batch, output_size), out_f32.shape
    assert jnp.allclose(out_f32, ref, atol=1e-5, rtol=1e-5), "f32 mismatch vs reference"

    # bf16 weights / MXU inputs (f32 accumulation): fast path, looser tolerance.
    packed_bf16 = pack_params(params, input_size, hidden_size, output_size,
                              compute_dtype=jnp.bfloat16)
    out_bf16 = jax.block_until_ready(liquid_nn_forward(packed_bf16, x, output_size))
    assert out_bf16.shape == (batch, output_size), out_bf16.shape
    assert jnp.allclose(out_bf16, ref, atol=8e-2, rtol=8e-2), "bf16 mismatch vs reference"

    print("KERNEL_OK")
</pallas_src>

<mosaic_0001>
module attributes {stable_mosaic.version = 11 : i64} {
  func.func @_fused_liquid_kernel(%arg0: i32, %arg1: memref<8x128xf32, #tpu.memory_space<vmem>>, %arg2: memref<128x128xf32, #tpu.memory_space<vmem>>, %arg3: memref<2x128x128xf32, #tpu.memory_space<vmem>>, %arg4: memref<3x1x128xf32, #tpu.memory_space<vmem>>, %arg5: memref<3x128x128xf32, #tpu.memory_space<vmem>>, %arg6: memref<3x1x128xf32, #tpu.memory_space<vmem>>, %arg7: memref<128x128xf32, #tpu.memory_space<vmem>>, %arg8: memref<1x128xf32, #tpu.memory_space<vmem>>, %arg9: memref<8x128xf32, #tpu.memory_space<vmem>>) attributes {dimension_semantics = [#tpu.dimension_semantics<parallel>], iteration_bounds = array<i64: 1>, scalar_prefetch = 0 : i64, scratch_operands = 0 : i64, tpu.core_type = #tpu.core_type<tc>, window_params = [{transform_indices = @transform_0, window_bounds = array<i64: 8, 128>}, {pipeline_mode = #tpu.pipeline_mode<synchronous>, transform_indices = @transform_1, window_bounds = array<i64: 128, 128>}, {pipeline_mode = #tpu.pipeline_mode<synchronous>, transform_indices = @transform_2, window_bounds = array<i64: 2, 128, 128>}, {pipeline_mode = #tpu.pipeline_mode<synchronous>, transform_indices = @transform_3, window_bounds = array<i64: 3, 1, 128>}, {pipeline_mode = #tpu.pipeline_mode<synchronous>, transform_indices = @transform_4, window_bounds = array<i64: 3, 128, 128>}, {pipeline_mode = #tpu.pipeline_mode<synchronous>, transform_indices = @transform_5, window_bounds = array<i64: 3, 1, 128>}, {pipeline_mode = #tpu.pipeline_mode<synchronous>, transform_indices = @transform_6, window_bounds = array<i64: 128, 128>}, {pipeline_mode = #tpu.pipeline_mode<synchronous>, transform_indices = @transform_7, window_bounds = array<i64: 1, 128>}, {transform_indices = @transform_8, window_bounds = array<i64: 8, 128>}]} {
    %c0 = arith.constant 0 : index
    %c0_0 = arith.constant 0 : index
    %0 = vector.load %arg1[%c0, %c0_0] : memref<8x128xf32, #tpu.memory_space<vmem>>, vector<8x128xf32>
    %c0_1 = arith.constant 0 : index
    %c0_2 = arith.constant 0 : index
    %1 = vector.load %arg2[%c0_1, %c0_2] : memref<128x128xf32, #tpu.memory_space<vmem>>, vector<128x128xf32>
    %c0_3 = arith.constant 0 : index
    %c0_4 = arith.constant 0 : index
    %c0_5 = arith.constant 0 : index
    %2 = vector.load %arg4[%c0_3, %c0_4, %c0_5] : memref<3x1x128xf32, #tpu.memory_space<vmem>>, vector<1x1x128xf32>
    %3 = vector.shape_cast %2 : vector<1x1x128xf32> to vector<1x128xf32>
    %c0_6 = arith.constant 0 : index
    %c0_7 = arith.constant 0 : index
    %c0_8 = arith.constant 0 : index
    %4 = vector.load %arg5[%c0_6, %c0_7, %c0_8] : memref<3x128x128xf32, #tpu.memory_space<vmem>>, vector<1x128x128xf32>
    %5 = vector.shape_cast %4 : vector<1x128x128xf32> to vector<128x128xf32>
    %c0_9 = arith.constant 0 : index
    %c0_10 = arith.constant 0 : index
    %c0_11 = arith.constant 0 : index
    %6 = vector.load %arg6[%c0_9, %c0_10, %c0_11] : memref<3x1x128xf32, #tpu.memory_space<vmem>>, vector<1x1x128xf32>
    %7 = vector.shape_cast %6 : vector<1x1x128xf32> to vector<1x128xf32>
    %cst = arith.constant dense<0.000000e+00> : vector<8x128xf32>
    %8 = tpu.matmul %0, %1, %cst {dimension_numbers = #tpu.dot_dimension_numbers<[1], [0], [0], [1], [0, 0, 1, 1], [], []>} : vector<8x128xf32>, vector<128x128xf32>, vector<8x128xf32> -> vector<8x128xf32>
    %9 = vector.broadcast %3 : vector<1x128xf32> to vector<8x128xf32>
    %10 = arith.addf %8, %9 : vector<8x128xf32>
    %cst_12 = arith.constant 0.00999999977 : f32
    %11 = vector.broadcast %cst_12 : f32 to vector<8x128xf32>
    %12 = arith.mulf %11, %10 : vector<8x128xf32>
    %13 = arith.maximumf %10, %12 : vector<8x128xf32>
    %cst_13 = arith.constant dense<0.000000e+00> : vector<8x128xf32>
    %14 = tpu.matmul %13, %5, %cst_13 {dimension_numbers = #tpu.dot_dimension_numbers<[1], [0], [0], [1], [0, 0, 1, 1], [], []>} : vector<8x128xf32>, vector<128x128xf32>, vector<8x128xf32> -> vector<8x128xf32>
    %15 = vector.broadcast %7 : vector<1x128xf32> to vector<8x128xf32>
    %16 = arith.addf %14, %15 : vector<8x128xf32>
    %c0_14 = arith.constant 0 : index
    %c0_15 = arith.constant 0 : index
    %c0_16 = arith.constant 0 : index
    %17 = vector.load %arg3[%c0_14, %c0_15, %c0_16] : memref<2x128x128xf32, #tpu.memory_space<vmem>>, vector<1x128x128xf32>
    %18 = vector.shape_cast %17 : vector<1x128x128xf32> to vector<128x128xf32>
    %c1 = arith.constant 1 : index
    %c0_17 = arith.constant 0 : index
    %c0_18 = arith.constant 0 : index
    %19 = vector.load %arg4[%c1, %c0_17, %c0_18] : memref<3x1x128xf32, #tpu.memory_space<vmem>>, vector<1x1x128xf32>
    %20 = vector.shape_cast %19 : vector<1x1x128xf32> to vector<1x128xf32>
    %c1_19 = arith.constant 1 : index
    %c0_20 = arith.constant 0 : index
    %c0_21 = arith.constant 0 : index
    %21 = vector.load %arg5[%c1_19, %c0_20, %c0_21] : memref<3x128x128xf32, #tpu.memory_space<vmem>>, vector<1x128x128xf32>
    %22 = vector.shape_cast %21 : vector<1x128x128xf32> to vector<128x128xf32>
    %c1_22 = arith.constant 1 : index
    %c0_23 = arith.constant 0 : index
    %c0_24 = arith.constant 0 : index
    %23 = vector.load %arg6[%c1_22, %c0_23, %c0_24] : memref<3x1x128xf32, #tpu.memory_space<vmem>>, vector<1x1x128xf32>
    %24 = vector.shape_cast %23 : vector<1x1x128xf32> to vector<1x128xf32>
    %cst_25 = arith.constant dense<0.000000e+00> : vector<8x128xf32>
    %25 = tpu.matmul %16, %18, %cst_25 {dimension_numbers = #tpu.dot_dimension_numbers<[1], [0], [0], [1], [0, 0, 1, 1], [], []>} : vector<8x128xf32>, vector<128x128xf32>, vector<8x128xf32> -> vector<8x128xf32>
    %26 = vector.broadcast %20 : vector<1x128xf32> to vector<8x128xf32>
    %27 = arith.addf %25, %26 : vector<8x128xf32>
    %cst_26 = arith.constant 0.00999999977 : f32
    %28 = vector.broadcast %cst_26 : f32 to vector<8x128xf32>
    %29 = arith.mulf %28, %27 : vector<8x128xf32>
    %30 = arith.maximumf %27, %29 : vector<8x128xf32>
    %cst_27 = arith.constant dense<0.000000e+00> : vector<8x128xf32>
    %31 = tpu.matmul %30, %22, %cst_27 {dimension_numbers = #tpu.dot_dimension_numbers<[1], [0], [0], [1], [0, 0, 1, 1], [], []>} : vector<8x128xf32>, vector<128x128xf32>, vector<8x128xf32> -> vector<8x128xf32>
    %32 = vector.broadcast %24 : vector<1x128xf32> to vector<8x128xf32>
    %33 = arith.addf %31, %32 : vector<8x128xf32>
    %c1_28 = arith.constant 1 : index
    %c0_29 = arith.constant 0 : index
    %c0_30 = arith.constant 0 : index
    %34 = vector.load %arg3[%c1_28, %c0_29, %c0_30] : memref<2x128x128xf32, #tpu.memory_space<vmem>>, vector<1x128x128xf32>
    %35 = vector.shape_cast %34 : vector<1x128x128xf32> to vector<128x128xf32>
    %c2 = arith.constant 2 : index
    %c0_31 = arith.constant 0 : index
    %c0_32 = arith.constant 0 : index
    %36 = vector.load %arg4[%c2, %c0_31, %c0_32] : memref<3x1x128xf32, #tpu.memory_space<vmem>>, vector<1x1x128xf32>
    %37 = vector.shape_cast %36 : vector<1x1x128xf32> to vector<1x128xf32>
    %c2_33 = arith.constant 2 : index
    %c0_34 = arith.constant 0 : index
    %c0_35 = arith.constant 0 : index
    %38 = vector.load %arg5[%c2_33, %c0_34, %c0_35] : memref<3x128x128xf32, #tpu.memory_space<vmem>>, vector<1x128x128xf32>
    %39 = vector.shape_cast %38 : vector<1x128x128xf32> to vector<128x128xf32>
    %c2_36 = arith.constant 2 : index
    %c0_37 = arith.constant 0 : index
    %c0_38 = arith.constant 0 : index
    %40 = vector.load %arg6[%c2_36, %c0_37, %c0_38] : memref<3x1x128xf32, #tpu.memory_space<vmem>>, vector<1x1x128xf32>
    %41 = vector.shape_cast %40 : vector<1x1x128xf32> to vector<1x128xf32>
    %cst_39 = arith.constant dense<0.000000e+00> : vector<8x128xf32>
    %42 = tpu.matmul %33, %35, %cst_39 {dimension_numbers = #tpu.dot_dimension_numbers<[1], [0], [0], [1], [0, 0, 1, 1], [], []>} : vector<8x128xf32>, vector<128x128xf32>, vector<8x128xf32> -> vector<8x128xf32>
    %43 = vector.broadcast %37 : vector<1x128xf32> to vector<8x128xf32>
    %44 = arith.addf %42, %43 : vector<8x128xf32>
    %cst_40 = arith.constant 0.00999999977 : f32
    %45 = vector.broadcast %cst_40 : f32 to vector<8x128xf32>
    %46 = arith.mulf %45, %44 : vector<8x128xf32>
    %47 = arith.maximumf %44, %46 : vector<8x128xf32>
    %cst_41 = arith.constant dense<0.000000e+00> : vector<8x128xf32>
    %48 = tpu.matmul %47, %39, %cst_41 {dimension_numbers = #tpu.dot_dimension_numbers<[1], [0], [0], [1], [0, 0, 1, 1], [], []>} : vector<8x128xf32>, vector<128x128xf32>, vector<8x128xf32> -> vector<8x128xf32>
    %49 = vector.broadcast %41 : vector<1x128xf32> to vector<8x128xf32>
    %50 = arith.addf %48, %49 : vector<8x128xf32>
    %c0_42 = arith.constant 0 : index
    %c0_43 = arith.constant 0 : index
    %51 = vector.load %arg7[%c0_42, %c0_43] : memref<128x128xf32, #tpu.memory_space<vmem>>, vector<128x128xf32>
    %cst_44 = arith.constant dense<0.000000e+00> : vector<8x128xf32>
    %52 = tpu.matmul %50, %51, %cst_44 {dimension_numbers = #tpu.dot_dimension_numbers<[1], [0], [0], [1], [0, 0, 1, 1], [], []>} : vector<8x128xf32>, vector<128x128xf32>, vector<8x128xf32> -> vector<8x128xf32>
    %c0_45 = arith.constant 0 : index
    %c0_46 = arith.constant 0 : index
    %53 = vector.load %arg8[%c0_45, %c0_46] : memref<1x128xf32, #tpu.memory_space<vmem>>, vector<1x128xf32>
    %54 = vector.broadcast %53 : vector<1x128xf32> to vector<8x128xf32>
    %55 = arith.addf %52, %54 : vector<8x128xf32>
    %c0_47 = arith.constant 0 : index
    %c0_48 = arith.constant 0 : index
    %56 = vector.load %arg9[%c0_47, %c0_48] : memref<8x128xf32, #tpu.memory_space<vmem>>, vector<8x128xf32>
    tpu.vector_store %arg9[%c0_47, %c0_48], %55 {strides = array<i32>} : memref<8x128xf32, #tpu.memory_space<vmem>>, vector<8x128xf32>,
    return
  }
  func.func @transform_0(%arg0: i32) -> (i32, i32) {
    %c0_i32 = arith.constant 0 : i32
    %c0_i32_0 = arith.constant 0 : i32
    return %arg0, %c0_i32 : i32, i32
  }
  func.func @transform_1(%arg0: i32) -> (i32, i32) {
    %c0_i32 = arith.constant 0 : i32
    %c0_i32_0 = arith.constant 0 : i32
    %c0_i32_1 = arith.constant 0 : i32
    return %c0_i32, %c0_i32_0 : i32, i32
  }
  func.func @transform_2(%arg0: i32) -> (i32, i32, i32) {
    %c0_i32 = arith.constant 0 : i32
    %c0_i32_0 = arith.constant 0 : i32
    %c0_i32_1 = arith.constant 0 : i32
    %c0_i32_2 = arith.constant 0 : i32
    return %c0_i32, %c0_i32_0, %c0_i32_1 : i32, i32, i32
  }
  func.func @transform_3(%arg0: i32) -> (i32, i32, i32) {
    %c0_i32 = arith.constant 0 : i32
    %c0_i32_0 = arith.constant 0 : i32
    %c0_i32_1 = arith.constant 0 : i32
    %c0_i32_2 = arith.constant 0 : i32
    return %c0_i32, %c0_i32_0, %c0_i32_1 : i32, i32, i32
  }
  func.func @transform_4(%arg0: i32) -> (i32, i32, i32) {
    %c0_i32 = arith.constant 0 : i32
    %c0_i32_0 = arith.constant 0 : i32
    %c0_i32_1 = arith.constant 0 : i32
    %c0_i32_2 = arith.constant 0 : i32
    return %c0_i32, %c0_i32_0, %c0_i32_1 : i32, i32, i32
  }
  func.func @transform_5(%arg0: i32) -> (i32, i32, i32) {
    %c0_i32 = arith.constant 0 : i32
    %c0_i32_0 = arith.constant 0 : i32
    %c0_i32_1 = arith.constant 0 : i32
    %c0_i32_2 = arith.constant 0 : i32
    return %c0_i32, %c0_i32_0, %c0_i32_1 : i32, i32, i32
  }
  func.func @transform_6(%arg0: i32) -> (i32, i32) {
    %c0_i32 = arith.constant 0 : i32
    %c0_i32_0 = arith.constant 0 : i32
    %c0_i32_1 = arith.constant 0 : i32
    return %c0_i32, %c0_i32_0 : i32, i32
  }
  func.func @transform_7(%arg0: i32) -> (i32, i32) {
    %c0_i32 = arith.constant 0 : i32
    %c0_i32_0 = arith.constant 0 : i32
    %c0_i32_1 = arith.constant 0 : i32
    return %c0_i32, %c0_i32_0 : i32, i32
  }
  func.func @transform_8(%arg0: i32) -> (i32, i32) {
    %c0_i32 = arith.constant 0 : i32
    %c0_i32_0 = arith.constant 0 : i32
    return %arg0, %c0_i32 : i32, i32
  }
}

module attributes {stable_mosaic.version = 11 : i64} {
  func.func @_fused_liquid_kernel(%arg0: i32, %arg1: memref<8x128xf32, #tpu.memory_space<vmem>>, %arg2: memref<128x128xf32, #tpu.memory_space<vmem>>, %arg3: memref<2x128x128xf32, #tpu.memory_space<vmem>>, %arg4: memref<3x1x128xf32, #tpu.memory_space<vmem>>, %arg5: memref<3x128x128xf32, #tpu.memory_space<vmem>>, %arg6: memref<3x1x128xf32, #tpu.memory_space<vmem>>, %arg7: memref<128x128xf32, #tpu.memory_space<vmem>>, %arg8: memref<1x128xf32, #tpu.memory_space<vmem>>, %arg9: memref<8x128xf32, #tpu.memory_space<vmem>>) attributes {dimension_semantics = [#tpu.dimension_semantics<parallel>], iteration_bounds = array<i64: 1>, scalar_prefetch = 0 : i64, scratch_operands = 0 : i64, tpu.core_type = #tpu.core_type<tc>, window_params = [{transform_indices = @transform_0, window_bounds = array<i64: 8, 128>}, {pipeline_mode = #tpu.pipeline_mode<synchronous>, transform_indices = @transform_1, window_bounds = array<i64: 128, 128>}, {pipeline_mode = #tpu.pipeline_mode<synchronous>, transform_indices = @transform_2, window_bounds = array<i64: 2, 128, 128>}, {pipeline_mode = #tpu.pipeline_mode<synchronous>, transform_indices = @transform_3, window_bounds = array<i64: 3, 1, 128>}, {pipeline_mode = #tpu.pipeline_mode<synchronous>, transform_indices = @transform_4, window_bounds = array<i64: 3, 128, 128>}, {pipeline_mode = #tpu.pipeline_mode<synchronous>, transform_indices = @transform_5, window_bounds = array<i64: 3, 1, 128>}, {pipeline_mode = #tpu.pipeline_mode<synchronous>, transform_indices = @transform_6, window_bounds = array<i64: 128, 128>}, {pipeline_mode = #tpu.pipeline_mode<synchronous>, transform_indices = @transform_7, window_bounds = array<i64: 1, 128>}, {transform_indices = @transform_8, window_bounds = array<i64: 8, 128>}]} {
    %c0 = arith.constant 0 : index
    %c0_0 = arith.constant 0 : index
    %0 = vector.load %arg1[%c0, %c0_0] : memref<8x128xf32, #tpu.memory_space<vmem>>, vector<8x128xf32>
    %c0_1 = arith.constant 0 : index
    %c0_2 = arith.constant 0 : index
    %1 = vector.load %arg2[%c0_1, %c0_2] : memref<128x128xf32, #tpu.memory_space<vmem>>, vector<128x128xf32>
    %c0_3 = arith.constant 0 : index
    %c0_4 = arith.constant 0 : index
    %c0_5 = arith.constant 0 : index
    %2 = vector.load %arg4[%c0_3, %c0_4, %c0_5] : memref<3x1x128xf32, #tpu.memory_space<vmem>>, vector<1x1x128xf32>
    %3 = vector.shape_cast %2 : vector<1x1x128xf32> to vector<1x128xf32>
    %c0_6 = arith.constant 0 : index
    %c0_7 = arith.constant 0 : index
    %c0_8 = arith.constant 0 : index
    %4 = vector.load %arg5[%c0_6, %c0_7, %c0_8] : memref<3x128x128xf32, #tpu.memory_space<vmem>>, vector<1x128x128xf32>
    %5 = vector.shape_cast %4 : vector<1x128x128xf32> to vector<128x128xf32>
    %c0_9 = arith.constant 0 : index
    %c0_10 = arith.constant 0 : index
    %c0_11 = arith.constant 0 : index
    %6 = vector.load %arg6[%c0_9, %c0_10, %c0_11] : memref<3x1x128xf32, #tpu.memory_space<vmem>>, vector<1x1x128xf32>
    %7 = vector.shape_cast %6 : vector<1x1x128xf32> to vector<1x128xf32>
    %cst = arith.constant dense<0.000000e+00> : vector<8x128xf32>
    %8 = tpu.matmul %0, %1, %cst {dimension_numbers = #tpu.dot_dimension_numbers<[1], [0], [0], [1], [0, 0, 1, 1], [], []>} : vector<8x128xf32>, vector<128x128xf32>, vector<8x128xf32> -> vector<8x128xf32>
    %9 = vector.broadcast %3 : vector<1x128xf32> to vector<8x128xf32>
    %10 = arith.addf %8, %9 : vector<8x128xf32>
    %cst_12 = arith.constant 0.00999999977 : f32
    %11 = vector.broadcast %cst_12 : f32 to vector<8x128xf32>
    %12 = arith.mulf %11, %10 : vector<8x128xf32>
    %13 = arith.maximumf %10, %12 : vector<8x128xf32>
    %cst_13 = arith.constant dense<0.000000e+00> : vector<8x128xf32>
    %14 = tpu.matmul %13, %5, %cst_13 {dimension_numbers = #tpu.dot_dimension_numbers<[1], [0], [0], [1], [0, 0, 1, 1], [], []>} : vector<8x128xf32>, vector<128x128xf32>, vector<8x128xf32> -> vector<8x128xf32>
    %15 = vector.broadcast %7 : vector<1x128xf32> to vector<8x128xf32>
    %16 = arith.addf %14, %15 : vector<8x128xf32>
    %c0_14 = arith.constant 0 : index
    %c0_15 = arith.constant 0 : index
    %c0_16 = arith.constant 0 : index
    %17 = vector.load %arg3[%c0_14, %c0_15, %c0_16] : memref<2x128x128xf32, #tpu.memory_space<vmem>>, vector<1x128x128xf32>
    %18 = vector.shape_cast %17 : vector<1x128x128xf32> to vector<128x128xf32>
    %c1 = arith.constant 1 : index
    %c0_17 = arith.constant 0 : index
    %c0_18 = arith.constant 0 : index
    %19 = vector.load %arg4[%c1, %c0_17, %c0_18] : memref<3x1x128xf32, #tpu.memory_space<vmem>>, vector<1x1x128xf32>
    %20 = vector.shape_cast %19 : vector<1x1x128xf32> to vector<1x128xf32>
    %c1_19 = arith.constant 1 : index
    %c0_20 = arith.constant 0 : index
    %c0_21 = arith.constant 0 : index
    %21 = vector.load %arg5[%c1_19, %c0_20, %c0_21] : memref<3x128x128xf32, #tpu.memory_space<vmem>>, vector<1x128x128xf32>
    %22 = vector.shape_cast %21 : vector<1x128x128xf32> to vector<128x128xf32>
    %c1_22 = arith.constant 1 : index
    %c0_23 = arith.constant 0 : index
    %c0_24 = arith.constant 0 : index
    %23 = vector.load %arg6[%c1_22, %c0_23, %c0_24] : memref<3x1x128xf32, #tpu.memory_space<vmem>>, vector<1x1x128xf32>
    %24 = vector.shape_cast %23 : vector<1x1x128xf32> to vector<1x128xf32>
    %cst_25 = arith.constant dense<0.000000e+00> : vector<8x128xf32>
    %25 = tpu.matmul %16, %18, %cst_25 {dimension_numbers = #tpu.dot_dimension_numbers<[1], [0], [0], [1], [0, 0, 1, 1], [], []>} : vector<8x128xf32>, vector<128x128xf32>, vector<8x128xf32> -> vector<8x128xf32>
    %26 = vector.broadcast %20 : vector<1x128xf32> to vector<8x128xf32>
    %27 = arith.addf %25, %26 : vector<8x128xf32>
    %cst_26 = arith.constant 0.00999999977 : f32
    %28 = vector.broadcast %cst_26 : f32 to vector<8x128xf32>
    %29 = arith.mulf %28, %27 : vector<8x128xf32>
    %30 = arith.maximumf %27, %29 : vector<8x128xf32>
    %cst_27 = arith.constant dense<0.000000e+00> : vector<8x128xf32>
    %31 = tpu.matmul %30, %22, %cst_27 {dimension_numbers = #tpu.dot_dimension_numbers<[1], [0], [0], [1], [0, 0, 1, 1], [], []>} : vector<8x128xf32>, vector<128x128xf32>, vector<8x128xf32> -> vector<8x128xf32>
    %32 = vector.broadcast %24 : vector<1x128xf32> to vector<8x128xf32>
    %33 = arith.addf %31, %32 : vector<8x128xf32>
    %c1_28 = arith.constant 1 : index
    %c0_29 = arith.constant 0 : index
    %c0_30 = arith.constant 0 : index
    %34 = vector.load %arg3[%c1_28, %c0_29, %c0_30] : memref<2x128x128xf32, #tpu.memory_space<vmem>>, vector<1x128x128xf32>
    %35 = vector.shape_cast %34 : vector<1x128x128xf32> to vector<128x128xf32>
    %c2 = arith.constant 2 : index
    %c0_31 = arith.constant 0 : index
    %c0_32 = arith.constant 0 : index
    %36 = vector.load %arg4[%c2, %c0_31, %c0_32] : memref<3x1x128xf32, #tpu.memory_space<vmem>>, vector<1x1x128xf32>
    %37 = vector.shape_cast %36 : vector<1x1x128xf32> to vector<1x128xf32>
    %c2_33 = arith.constant 2 : index
    %c0_34 = arith.constant 0 : index
    %c0_35 = arith.constant 0 : index
    %38 = vector.load %arg5[%c2_33, %c0_34, %c0_35] : memref<3x128x128xf32, #tpu.memory_space<vmem>>, vector<1x128x128xf32>
    %39 = vector.shape_cast %38 : vector<1x128x128xf32> to vector<128x128xf32>
    %c2_36 = arith.constant 2 : index
    %c0_37 = arith.constant 0 : index
    %c0_38 = arith.constant 0 : index
    %40 = vector.load %arg6[%c2_36, %c0_37, %c0_38] : memref<3x1x128xf32, #tpu.memory_space<vmem>>, vector<1x1x128xf32>
    %41 = vector.shape_cast %40 : vector<1x1x128xf32> to vector<1x128xf32>
    %cst_39 = arith.constant dense<0.000000e+00> : vector<8x128xf32>
    %42 = tpu.matmul %33, %35, %cst_39 {dimension_numbers = #tpu.dot_dimension_numbers<[1], [0], [0], [1], [0, 0, 1, 1], [], []>} : vector<8x128xf32>, vector<128x128xf32>, vector<8x128xf32> -> vector<8x128xf32>
    %43 = vector.broadcast %37 : vector<1x128xf32> to vector<8x128xf32>
    %44 = arith.addf %42, %43 : vector<8x128xf32>
    %cst_40 = arith.constant 0.00999999977 : f32
    %45 = vector.broadcast %cst_40 : f32 to vector<8x128xf32>
    %46 = arith.mulf %45, %44 : vector<8x128xf32>
    %47 = arith.maximumf %44, %46 : vector<8x128xf32>
    %cst_41 = arith.constant dense<0.000000e+00> : vector<8x128xf32>
    %48 = tpu.matmul %47, %39, %cst_41 {dimension_numbers = #tpu.dot_dimension_numbers<[1], [0], [0], [1], [0, 0, 1, 1], [], []>} : vector<8x128xf32>, vector<128x128xf32>, vector<8x128xf32> -> vector<8x128xf32>
    %49 = vector.broadcast %41 : vector<1x128xf32> to vector<8x128xf32>
    %50 = arith.addf %48, %49 : vector<8x128xf32>
    %c0_42 = arith.constant 0 : index
    %c0_43 = arith.constant 0 : index
    %51 = vector.load %arg7[%c0_42, %c0_43] : memref<128x128xf32, #tpu.memory_space<vmem>>, vector<128x128xf32>
    %cst_44 = arith.constant dense<0.000000e+00> : vector<8x128xf32>
    %52 = tpu.matmul %50, %51, %cst_44 {dimension_numbers = #tpu.dot_dimension_numbers<[1], [0], [0], [1], [0, 0, 1, 1], [], []>} : vector<8x128xf32>, vector<128x128xf32>, vector<8x128xf32> -> vector<8x128xf32>
    %c0_45 = arith.constant 0 : index
    %c0_46 = arith.constant 0 : index
    %53 = vector.load %arg8[%c0_45, %c0_46] : memref<1x128xf32, #tpu.memory_space<vmem>>, vector<1x128xf32>
    %54 = vector.broadcast %53 : vector<1x128xf32> to vector<8x128xf32>
    %55 = arith.addf %52, %54 : vector<8x128xf32>
    %c0_47 = arith.constant 0 : index
    %c0_48 = arith.constant 0 : index
    %56 = vector.load %arg9[%c0_47, %c0_48] : memref<8x128xf32, #tpu.memory_space<vmem>>, vector<8x128xf32>
    tpu.vector_store %arg9[%c0_47, %c0_48], %55 {strides = array<i32>} : memref<8x128xf32, #tpu.memory_space<vmem>>, vector<8x128xf32>,
    return
  }
  func.func @transform_0(%arg0: i32) -> (i32, i32) {
    %c0_i32 = arith.constant 0 : i32
    %c0_i32_0 = arith.constant 0 : i32
    return %arg0, %c0_i32 : i32, i32
  }
  func.func @transform_1(%arg0: i32) -> (i32, i32) {
    %c0_i32 = arith.constant 0 : i32
    %c0_i32_0 = arith.constant 0 : i32
    %c0_i32_1 = arith.constant 0 : i32
    return %c0_i32, %c0_i32_0 : i32, i32
  }
  func.func @transform_2(%arg0: i32) -> (i32, i32, i32) {
    %c0_i32 = arith.constant 0 : i32
    %c0_i32_0 = arith.constant 0 : i32
    %c0_i32_1 = arith.constant 0 : i32
    %c0_i32_2 = arith.constant 0 : i32
    return %c0_i32, %c0_i32_0, %c0_i32_1 : i32, i32, i32
  }
  func.func @transform_3(%arg0: i32) -> (i32, i32, i32) {
    %c0_i32 = arith.constant 0 : i32
    %c0_i32_0 = arith.constant 0 : i32
    %c0_i32_1 = arith.constant 0 : i32
    %c0_i32_2 = arith.constant 0 : i32
    return %c0_i32, %c0_i32_0, %c0_i32_1 : i32, i32, i32
  }
  func.func @transform_4(%arg0: i32) -> (i32, i32, i32) {
    %c0_i32 = arith.constant 0 : i32
    %c0_i32_0 = arith.constant 0 : i32
    %c0_i32_1 = arith.constant 0 : i32
    %c0_i32_2 = arith.constant 0 : i32
    return %c0_i32, %c0_i32_0, %c0_i32_1 : i32, i32, i32
  }
  func.func @transform_5(%arg0: i32) -> (i32, i32, i32) {
    %c0_i32 = arith.constant 0 : i32
    %c0_i32_0 = arith.constant 0 : i32
    %c0_i32_1 = arith.constant 0 : i32
    %c0_i32_2 = arith.constant 0 : i32
    return %c0_i32, %c0_i32_0, %c0_i32_1 : i32, i32, i32
  }
  func.func @transform_6(%arg0: i32) -> (i32, i32) {
    %c0_i32 = arith.constant 0 : i32
    %c0_i32_0 = arith.constant 0 : i32
    %c0_i32_1 = arith.constant 0 : i32
    return %c0_i32, %c0_i32_0 : i32, i32
  }
  func.func @transform_7(%arg0: i32) -> (i32, i32) {
    %c0_i32 = arith.constant 0 : i32
    %c0_i32_0 = arith.constant 0 : i32
    %c0_i32_1 = arith.constant 0 : i32
    return %c0_i32, %c0_i32_0 : i32, i32
  }
  func.func @transform_8(%arg0: i32) -> (i32, i32) {
    %c0_i32 = arith.constant 0 : i32
    %c0_i32_0 = arith.constant 0 : i32
    return %arg0, %c0_i32 : i32, i32
  }
}

</mosaic_0001>

<llo_original>
// kernel: tpu_custom_call.1
$region0: #{tpu_custom_call.1}
  #allocation0 [shape = 'u32[]', space=smem, size = 0x4, offset = 0x4, fixed_abs, tag = 'smem constant byte address 0x4 - core index']
  #allocation1 [shape = 'u32[72,128]{1,0:T(1,128)}', space=vmem, size = 0x9000, scoped, tag = 'internal scratch']
  %s0 = inlined_call_operand.hbm [shape: f32[8,128], index: 0, kind: input, shape index: {}]
  %s1 = inlined_call_operand.hbm [shape: f32[128,128], index: 1, kind: input, shape index: {}]
  %s2 = inlined_call_operand.hbm [shape: f32[2,128,128], index: 2, kind: input, shape index: {}]
  %s3 = inlined_call_operand.hbm [shape: f32[3,1,128], index: 3, kind: input, shape index: {}]
  %s4 = inlined_call_operand.hbm [shape: f32[3,128,128], index: 4, kind: input, shape index: {}]
  %s5 = inlined_call_operand.vmem [shape: f32[3,1,128], index: 5, kind: input, shape index: {}]
  %s6 = inlined_call_operand.hbm [shape: f32[128,128], index: 6, kind: input, shape index: {}]
  %s7 = inlined_call_operand.vmem [shape: f32[1,128], index: 7, kind: input, shape index: {}]
  %s8 = inlined_call_operand.hbm [shape: f32[8,128], index: 8, kind: output, shape index: {}]
  %s9 = sld [smem:[#allocation0]]
  $region66: #{tpu_custom_call.1} parent=0
    _
  %s11 = ssub.s32 1, %s9
  %s12 = scalar_select 0, %s11, %s9
  $region1: #{tpu_custom_call.1} parent=0
    #allocation2 [shape = 'u8[4096]{0}', space=vmem, size = 0x1000, scoped, tag = 'input window, operand 0, single buffered']
    #allocation3 [shape = 's32[1]{0}', space=sflag, size = 0x4, scoped, tag = 'scoped memory for tpu_custom_call.1']
    #allocation4 [shape = 's32[1]{0}', space=sflag, size = 0x4, scoped, tag = 'scoped memory for tpu_custom_call.1']
    #allocation5 [shape = 'u8[65536]{0}', space=vmem, size = 0x10000, scoped, tag = 'input window, operand 1, single buffered']
    #allocation6 [shape = 's32[1]{0}', space=sflag, size = 0x4, scoped, tag = 'scoped memory for tpu_custom_call.1']
    #allocation7 [shape = 'u8[131072]{0}', space=vmem, size = 0x20000, scoped, tag = 'input window, operand 2, single buffered']
    #allocation8 [shape = 'u8[1536]{0}', space=vmem, size = 0x800, scoped, tag = 'input window, operand 3, single buffered']
    #allocation9 [shape = 's32[1]{0}', space=sflag, size = 0x4, scoped, tag = 'scoped memory for tpu_custom_call.1']
    #allocation10 [shape = 'u8[196608]{0}', space=vmem, size = 0x30000, scoped, tag = 'input window, operand 4, single buffered']
    #allocation11 [shape = 'u8[65536]{0}', space=vmem, size = 0x10000, scoped, tag = 'input window, operand 6, single buffered']
    #allocation12 [shape = 's32[1]{0}', space=sflag, size = 0x4, scoped, tag = 'scoped memory for tpu_custom_call.1']
    #allocation13 [shape = 'u8[4096]{0}', space=vmem, size = 0x1000, scoped, tag = 'output window, operand 0, single buffered']
    %13 = vsyncpa [#allocation3], 0
    %14 = vsyncpa [#allocation6], 0
    %15 = vsyncpa [#allocation9], 0
    %16 = vsyncpa [#allocation12], 0
    %17 = vsyncpa [#allocation4], 0
    // Predicated region
    $region2: #{tpu_custom_call.1} parent=1 // pred_check
      _
    $region3: #{tpu_custom_call.1} parent=1 // pred_check_branch
      %19 = sbr.rel (0) target = $region5
    $region4: #{tpu_custom_call.1} parent=1 // pred_region
      %21 = vsyncadd [#allocation3], 0
      %s23 = sshll.u32 %s0, 4
      %s24 = int_to_ptr.hbm [resolvable:$true] %s23
      %s25 = sshll.u32 [#allocation2], 4
      %s26 = int_to_ptr.vmem [resolvable:$true] %s25
      %28 = dma.hbm_to_vmem [thread:$0]  %s24, 128, %s26, [#allocation3]
    $region5: #{tpu_custom_call.1} parent=1 // pred_fallthru
      _
    // Predicated region
    $region6: #{tpu_custom_call.1} parent=1 // pred_check
      _
    $region7: #{tpu_custom_call.1} parent=1 // pred_check_branch
      %30 = sbr.rel (0) target = $region9
    $region8: #{tpu_custom_call.1} parent=1 // pred_region
      %32 = vsyncadd [#allocation6], 0
      %s33 = sshll.u32 %s1, 4
      %s34 = int_to_ptr.hbm [resolvable:$true] %s33
      %s35 = sshll.u32 [#allocation5], 4
      %s36 = int_to_ptr.vmem [resolvable:$true] %s35
      %41 = dma.hbm_to_vmem [thread:$0]  %s34, 2048, %s36, [#allocation6], 128, 128, 8
    $region9: #{tpu_custom_call.1} parent=1 // pred_fallthru
      _
    // Predicated region
    $region10: #{tpu_custom_call.1} parent=1 // pred_check
      _
    $region11: #{tpu_custom_call.1} parent=1 // pred_check_branch
      %43 = sbr.rel (0) target = $region13
    $region12: #{tpu_custom_call.1} parent=1 // pred_region
      %45 = vsyncadd [#allocation6], 0
      %s46 = sshll.u32 %s2, 4
      %s47 = int_to_ptr.hbm [resolvable:$true] %s46
      %s48 = sshll.u32 [#allocation7], 4
      %s49 = int_to_ptr.vmem [resolvable:$true] %s48
      %54 = dma.hbm_to_vmem [thread:$0]  %s47, 4096, %s49, [#allocation6], 128, 128, 8
    $region13: #{tpu_custom_call.1} parent=1 // pred_fallthru
      _
    // Predicated region
    $region14: #{tpu_custom_call.1} parent=1 // pred_check
      _
    $region15: #{tpu_custom_call.1} parent=1 // pred_check_branch
      %56 = sbr.rel (0) target = $region17
    $region16: #{tpu_custom_call.1} parent=1 // pred_region
      %58 = vsyncadd [#allocation9], 0
      %s59 = sshll.u32 %s3, 4
      %s60 = int_to_ptr.hbm [resolvable:$true] %s59
      %s61 = sshll.u32 [#allocation8], 4
      %s62 = int_to_ptr.vmem [resolvable:$true] %s61
      %67 = dma.hbm_to_vmem [thread:$0]  %s60, 48, %s62, [#allocation9], 16, 16, 1
    $region17: #{tpu_custom_call.1} parent=1 // pred_fallthru
      _
    // Predicated region
    $region18: #{tpu_custom_call.1} parent=1 // pred_check
      _
    $region19: #{tpu_custom_call.1} parent=1 // pred_check_branch
      %69 = sbr.rel (0) target = $region21
    $region20: #{tpu_custom_call.1} parent=1 // pred_region
      %71 = vsyncadd [#allocation9], 0
      %s72 = sshll.u32 %s4, 4
      %s73 = int_to_ptr.hbm [resolvable:$true] %s72
      %s74 = sshll.u32 [#allocation10], 4
      %s75 = int_to_ptr.vmem [resolvable:$true] %s74
      %80 = dma.hbm_to_vmem [thread:$0]  %s73, 6144, %s75, [#allocation9], 128, 128, 8
    $region21: #{tpu_custom_call.1} parent=1 // pred_fallthru
      _
    // Predicated region
    $region22: #{tpu_custom_call.1} parent=1 // pred_check
      _
    $region23: #{tpu_custom_call.1} parent=1 // pred_check_branch
      %82 = sbr.rel (0) target = $region25
    $region24: #{tpu_custom_call.1} parent=1 // pred_region
      _
    $region25: #{tpu_custom_call.1} parent=1 // pred_fallthru
      _
    // Predicated region
    $region26: #{tpu_custom_call.1} parent=1 // pred_check
      _
    $region27: #{tpu_custom_call.1} parent=1 // pred_check_branch
      %84 = sbr.rel (0) target = $region29
    $region28: #{tpu_custom_call.1} parent=1 // pred_region
      %86 = vsyncadd [#allocation12], 0
      %s87 = sshll.u32 %s6, 4
      %s88 = int_to_ptr.hbm [resolvable:$true] %s87
      %s89 = sshll.u32 [#allocation11], 4
      %s90 = int_to_ptr.vmem [resolvable:$true] %s89
      %95 = dma.hbm_to_vmem [thread:$0]  %s88, 2048, %s90, [#allocation12], 128, 128, 8
    $region29: #{tpu_custom_call.1} parent=1 // pred_fallthru
      _
    // Predicated region
    $region30: #{tpu_custom_call.1} parent=1 // pred_check
      _
    $region31: #{tpu_custom_call.1} parent=1 // pred_check_branch
      %97 = sbr.rel (0) target = $region33
    $region32: #{tpu_custom_call.1} parent=1 // pred_region
      _
    $region33: #{tpu_custom_call.1} parent=1 // pred_fallthru
      _
    // Predicated region
    $region34: #{tpu_custom_call.1} parent=1 // pred_check
      _
    $region35: #{tpu_custom_call.1} parent=1 // pred_check_branch
      %99 = sbr.rel (0) target = $region37
    $region36: #{tpu_custom_call.1} parent=1 // pred_region
      %101 = dma.done [#allocation3], 128
    $region37: #{tpu_custom_call.1} parent=1 // pred_fallthru
      _
    // Predicated region
    $region38: #{tpu_custom_call.1} parent=1 // pred_check
      _
    $region39: #{tpu_custom_call.1} parent=1 // pred_check_branch
      %103 = sbr.rel (0) target = $region41
    $region40: #{tpu_custom_call.1} parent=1 // pred_region
      %105 = dma.done [#allocation6], 2048
    $region41: #{tpu_custom_call.1} parent=1 // pred_fallthru
      _
    // Predicated region
    $region42: #{tpu_custom_call.1} parent=1 // pred_check
      _
    $region43: #{tpu_custom_call.1} parent=1 // pred_check_branch
      %107 = sbr.rel (0) target = $region45
    $region44: #{tpu_custom_call.1} parent=1 // pred_region
      %109 = dma.done [#allocation6], 4096
    $region45: #{tpu_custom_call.1} parent=1 // pred_fallthru
      _
    // Predicated region
    $region46: #{tpu_custom_call.1} parent=1 // pred_check
      _
    $region47: #{tpu_custom_call.1} parent=1 // pred_check_branch
      %111 = sbr.rel (0) target = $region49
    $region48: #{tpu_custom_call.1} parent=1 // pred_region
      %113 = dma.done [#allocation9], 48
    $region49: #{tpu_custom_call.1} parent=1 // pred_fallthru
      _
    // Predicated region
    $region50: #{tpu_custom_call.1} parent=1 // pred_check
      _
    $region51: #{tpu_custom_call.1} parent=1 // pred_check_branch
      %115 = sbr.rel (0) target = $region53
    $region52: #{tpu_custom_call.1} parent=1 // pred_region
      %117 = dma.done [#allocation9], 6144
    $region53: #{tpu_custom_call.1} parent=1 // pred_fallthru
      _
    // Predicated region
    $region54: #{tpu_custom_call.1} parent=1 // pred_check
      _
    $region55: #{tpu_custom_call.1} parent=1 // pred_check_branch
      %119 = sbr.rel (0) target = $region57
    $region56: #{tpu_custom_call.1} parent=1 // pred_region
      %121 = dma.done [#allocation12], 2048
    $region57: #{tpu_custom_call.1} parent=1 // pred_fallthru
      _
    %v122 = vld [vmem:[#allocation2] sm:$0xff]
    %v123 = vld [vmem:[#allocation5] sm:$0xff]
    %v124 = vld [vmem:[#allocation5 + $0x8] sm:$0xff]
    %v125 = vld [vmem:[#allocation5 + $0x10] sm:$0xff]
    %v126 = vld [vmem:[#allocation5 + $0x18] sm:$0xff]
    %v127 = vld [vmem:[#allocation5 + $0x20] sm:$0xff]
    %v128 = vld [vmem:[#allocation5 + $0x28] sm:$0xff]
    %v129 = vld [vmem:[#allocation5 + $0x30] sm:$0xff]
    %v130 = vld [vmem:[#allocation5 + $0x38] sm:$0xff]
    %v131 = vld [vmem:[#allocation5 + $0x40] sm:$0xff]
    %v132 = vld [vmem:[#allocation5 + $0x48] sm:$0xff]
    %v133 = vld [vmem:[#allocation5 + $0x50] sm:$0xff]
    %v134 = vld [vmem:[#allocation5 + $0x58] sm:$0xff]
    %v135 = vld [vmem:[#allocation5 + $0x60] sm:$0xff]
    %v136 = vld [vmem:[#allocation5 + $0x68] sm:$0xff]
    %v137 = vld [vmem:[#allocation5 + $0x70] sm:$0xff]
    %v138 = vld [vmem:[#allocation5 + $0x78] sm:$0xff]
    %v139 = vld [vmem:[#allocation8] sm:$0x1]
    %v140 = vld [vmem:[#allocation10] sm:$0xff]
    %v141 = vld [vmem:[#allocation10 + $0x8] sm:$0xff]
    %v142 = vld [vmem:[#allocation10 + $0x10] sm:$0xff]
    %v143 = vld [vmem:[#allocation10 + $0x18] sm:$0xff]
    %v144 = vld [vmem:[#allocation10 + $0x20] sm:$0xff]
    %v145 = vld [vmem:[#allocation10 + $0x28] sm:$0xff]
    %v146 = vld [vmem:[#allocation10 + $0x30] sm:$0xff]
    %v147 = vld [vmem:[#allocation10 + $0x38] sm:$0xff]
    %v148 = vld [vmem:[#allocation10 + $0x40] sm:$0xff]
    %v149 = vld [vmem:[#allocation10 + $0x48] sm:$0xff]
    %v150 = vld [vmem:[#allocation10 + $0x50] sm:$0xff]
    %v151 = vld [vmem:[#allocation10 + $0x58] sm:$0xff]
    %v152 = vld [vmem:[#allocation10 + $0x60] sm:$0xff]
    %v153 = vld [vmem:[#allocation10 + $0x68] sm:$0xff]
    %v154 = vld [vmem:[#allocation10 + $0x70] sm:$0xff]
    %v155 = vld [vmem:[#allocation10 + $0x78] sm:$0xff]
    %v156 = vld [vmem:[%s5] sm:$0x1]
    %v158 = vperm.slane %v139, 0
    %160 = vmatpush.msra.mxu0 %v138
    %161 = vmatpush.msra.mxu0 %v137
    %162 = vmatpush.msra.mxu0 %v136
    %163 = vmatpush.msra.mxu0 %v135
    %164 = vmatpush.msra.mxu0 %v134
    %165 = vmatpush.msra.mxu0 %v133
    %166 = vmatpush.msra.mxu0 %v132
    %167 = vmatpush.msra.mxu0 %v131
    %168 = vmatpush.msra.mxu0 %v130
    %169 = vmatpush.msra.mxu0 %v129
    %170 = vmatpush.msra.mxu0 %v128
    %171 = vmatpush.msra.mxu0 %v127
    %172 = vmatpush.msra.mxu0 %v126
    %173 = vmatpush.msra.mxu0 %v125
    %174 = vmatpush.msra.mxu0 %v124
    %175 = vmatpush.msra.mxu0 %v123
    %176 = vmatmul.f32.gmra.mxu0 %v122
    %v177 = vpop.f32.mrf.mxu0
    %v178 = vadd.f32 %v158, %v177
    %179 = vdwg.mxu0
    %v180 = vmul.f32 %v178, 0.01
    %v181 = vmax.f32 %v178, %v180
    %v183 = vperm.slane %v156, 0
    %185 = vmatpush.msra.mxu0 %v155
    %186 = vmatpush.msra.mxu0 %v154
    %187 = vmatpush.msra.mxu0 %v153
    %188 = vmatpush.msra.mxu0 %v152
    %189 = vmatpush.msra.mxu0 %v151
    %190 = vmatpush.msra.mxu0 %v150
    %191 = vmatpush.msra.mxu0 %v149
    %192 = vmatpush.msra.mxu0 %v148
    %193 = vmatpush.msra.mxu0 %v147
    %194 = vmatpush.msra.mxu0 %v146
    %195 = vmatpush.msra.mxu0 %v145
    %196 = vmatpush.msra.mxu0 %v144
    %197 = vmatpush.msra.mxu0 %v143
    %198 = vmatpush.msra.mxu0 %v142
    %199 = vmatpush.msra.mxu0 %v141
    %200 = vmatpush.msra.mxu0 %v140
    %201 = vmatmul.f32.gmra.mxu0 %v181
    %v202 = vpop.f32.mrf.mxu0
    %v203 = vadd.f32 %v183, %v202
    %204 = vdwg.mxu0
    %v205 = vld [vmem:[#allocation7] sm:$0xff]
    %v206 = vld [vmem:[#allocation7 + $0x8] sm:$0xff]
    %v207 = vld [vmem:[#allocation7 + $0x10] sm:$0xff]
    %v208 = vld [vmem:[#allocation7 + $0x18] sm:$0xff]
    %v209 = vld [vmem:[#allocation7 + $0x20] sm:$0xff]
    %v210 = vld [vmem:[#allocation7 + $0x28] sm:$0xff]
    %v211 = vld [vmem:[#allocation7 + $0x30] sm:$0xff]
    %v212 = vld [vmem:[#allocation7 + $0x38] sm:$0xff]
    %v213 = vld [vmem:[#allocation7 + $0x40] sm:$0xff]
    %v214 = vld [vmem:[#allocation7 + $0x48] sm:$0xff]
    %v215 = vld [vmem:[#allocation7 + $0x50] sm:$0xff]
    %v216 = vld [vmem:[#allocation7 + $0x58] sm:$0xff]
    %v217 = vld [vmem:[#allocation7 + $0x60] sm:$0xff]
    %v218 = vld [vmem:[#allocation7 + $0x68] sm:$0xff]
    %v219 = vld [vmem:[#allocation7 + $0x70] sm:$0xff]
    %v220 = vld [vmem:[#allocation7 + $0x78] sm:$0xff]
    %s221 = scalar_lea.vmem [#allocation8], 1
    %v222 = vld [vmem:[%s221] sm:$0x1]
    %s223 = scalar_lea.vmem [#allocation10], 128
    %v224 = vld [vmem:[%s223] sm:$0xff]
    %v225 = vld [vmem:[%s223 + $0x8] sm:$0xff]
    %v226 = vld [vmem:[%s223 + $0x10] sm:$0xff]
    %v227 = vld [vmem:[%s223 + $0x18] sm:$0xff]
    %v228 = vld [vmem:[%s223 + $0x20] sm:$0xff]
    %v229 = vld [vmem:[%s223 + $0x28] sm:$0xff]
    %v230 = vld [vmem:[%s223 + $0x30] sm:$0xff]
    %v231 = vld [vmem:[%s223 + $0x38] sm:$0xff]
    %v232 = vld [vmem:[%s223 + $0x40] sm:$0xff]
    %v233 = vld [vmem:[%s223 + $0x48] sm:$0xff]
    %v234 = vld [vmem:[%s223 + $0x50] sm:$0xff]
    %v235 = vld [vmem:[%s223 + $0x58] sm:$0xff]
    %v236 = vld [vmem:[%s223 + $0x60] sm:$0xff]
    %v237 = vld [vmem:[%s223 + $0x68] sm:$0xff]
    %v238 = vld [vmem:[%s223 + $0x70] sm:$0xff]
    %v239 = vld [vmem:[%s223 + $0x78] sm:$0xff]
    %s240 = scalar_lea.vmem %s5, 1
    %v241 = vld [vmem:[%s240] sm:$0x1]
    %v243 = vperm.slane %v222, 0
    %245 = vmatpush.msra.mxu0 %v220
    %246 = vmatpush.msra.mxu0 %v219
    %247 = vmatpush.msra.mxu0 %v218
    %248 = vmatpush.msra.mxu0 %v217
    %249 = vmatpush.msra.mxu0 %v216
    %250 = vmatpush.msra.mxu0 %v215
    %251 = vmatpush.msra.mxu0 %v214
    %252 = vmatpush.msra.mxu0 %v213
    %253 = vmatpush.msra.mxu0 %v212
    %254 = vmatpush.msra.mxu0 %v211
    %255 = vmatpush.msra.mxu0 %v210
    %256 = vmatpush.msra.mxu0 %v209
    %257 = vmatpush.msra.mxu0 %v208
    %258 = vmatpush.msra.mxu0 %v207
    %259 = vmatpush.msra.mxu0 %v206
    %260 = vmatpush.msra.mxu0 %v205
    %261 = vmatmul.f32.gmra.mxu0 %v203
    %v262 = vpop.f32.mrf.mxu0
    %v263 = vadd.f32 %v243, %v262
    %264 = vdwg.mxu0
    %v265 = vmul.f32 %v263, 0.01
    %v266 = vmax.f32 %v263, %v265
    %v268 = vperm.slane %v241, 0
    %270 = vmatpush.msra.mxu0 %v239
    %271 = vmatpush.msra.mxu0 %v238
    %272 = vmatpush.msra.mxu0 %v237
    %273 = vmatpush.msra.mxu0 %v236
    %274 = vmatpush.msra.mxu0 %v235
    %275 = vmatpush.msra.mxu0 %v234
    %276 = vmatpush.msra.mxu0 %v233
    %277 = vmatpush.msra.mxu0 %v232
    %278 = vmatpush.msra.mxu0 %v231
    %279 = vmatpush.msra.mxu0 %v230
    %280 = vmatpush.msra.mxu0 %v229
    %281 = vmatpush.msra.mxu0 %v228
    %282 = vmatpush.msra.mxu0 %v227
    %283 = vmatpush.msra.mxu0 %v226
    %284 = vmatpush.msra.mxu0 %v225
    %285 = vmatpush.msra.mxu0 %v224
    %286 = vmatmul.f32.gmra.mxu0 %v266
    %v287 = vpop.f32.mrf.mxu0
    %v288 = vadd.f32 %v268, %v287
    %289 = vdwg.mxu0
    %s290 = scalar_lea.vmem [#allocation7], 128
    %v291 = vld [vmem:[%s290] sm:$0xff]
    %v292 = vld [vmem:[%s290 + $0x8] sm:$0xff]
    %v293 = vld [vmem:[%s290 + $0x10] sm:$0xff]
    %v294 = vld [vmem:[%s290 + $0x18] sm:$0xff]
    %v295 = vld [vmem:[%s290 + $0x20] sm:$0xff]
    %v296 = vld [vmem:[%s290 + $0x28] sm:$0xff]
    %v297 = vld [vmem:[%s290 + $0x30] sm:$0xff]
    %v298 = vld [vmem:[%s290 + $0x38] sm:$0xff]
    %v299 = vld [vmem:[%s290 + $0x40] sm:$0xff]
    %v300 = vld [vmem:[%s290 + $0x48] sm:$0xff]
    %v301 = vld [vmem:[%s290 + $0x50] sm:$0xff]
    %v302 = vld [vmem:[%s290 + $0x58] sm:$0xff]
    %v303 = vld [vmem:[%s290 + $0x60] sm:$0xff]
    %v304 = vld [vmem:[%s290 + $0x68] sm:$0xff]
    %v305 = vld [vmem:[%s290 + $0x70] sm:$0xff]
    %v306 = vld [vmem:[%s290 + $0x78] sm:$0xff]
    %s307 = scalar_lea.vmem [#allocation8], 2
    %v308 = vld [vmem:[%s307] sm:$0x1]
    %s309 = scalar_lea.vmem [#allocation10], 256
    %v310 = vld [vmem:[%s309] sm:$0xff]
    %v311 = vld [vmem:[%s309 + $0x8] sm:$0xff]
    %v312 = vld [vmem:[%s309 + $0x10] sm:$0xff]
    %v313 = vld [vmem:[%s309 + $0x18] sm:$0xff]
    %v314 = vld [vmem:[%s309 + $0x20] sm:$0xff]
    %v315 = vld [vmem:[%s309 + $0x28] sm:$0xff]
    %v316 = vld [vmem:[%s309 + $0x30] sm:$0xff]
    %v317 = vld [vmem:[%s309 + $0x38] sm:$0xff]
    %v318 = vld [vmem:[%s309 + $0x40] sm:$0xff]
    %v319 = vld [vmem:[%s309 + $0x48] sm:$0xff]
    %v320 = vld [vmem:[%s309 + $0x50] sm:$0xff]
    %v321 = vld [vmem:[%s309 + $0x58] sm:$0xff]
    %v322 = vld [vmem:[%s309 + $0x60] sm:$0xff]
    %v323 = vld [vmem:[%s309 + $0x68] sm:$0xff]
    %v324 = vld [vmem:[%s309 + $0x70] sm:$0xff]
    %v325 = vld [vmem:[%s309 + $0x78] sm:$0xff]
    %s326 = scalar_lea.vmem %s5, 2
    %v327 = vld [vmem:[%s326] sm:$0x1]
    %v329 = vperm.slane %v308, 0
    %331 = vmatpush.msra.mxu0 %v306
    %332 = vmatpush.msra.mxu0 %v305
    %333 = vmatpush.msra.mxu0 %v304
    %334 = vmatpush.msra.mxu0 %v303
    %335 = vmatpush.msra.mxu0 %v302
    %336 = vmatpush.msra.mxu0 %v301
    %337 = vmatpush.msra.mxu0 %v300
    %338 = vmatpush.msra.mxu0 %v299
    %339 = vmatpush.msra.mxu0 %v298
    %340 = vmatpush.msra.mxu0 %v297
    %341 = vmatpush.msra.mxu0 %v296
    %342 = vmatpush.msra.mxu0 %v295
    %343 = vmatpush.msra.mxu0 %v294
    %344 = vmatpush.msra.mxu0 %v293
    %345 = vmatpush.msra.mxu0 %v292
    %346 = vmatpush.msra.mxu0 %v291
    %347 = vmatmul.f32.gmra.mxu0 %v288
    %v348 = vpop.f32.mrf.mxu0
    %v349 = vadd.f32 %v329, %v348
    %350 = vdwg.mxu0
    %v351 = vmul.f32 %v349, 0.01
    %v352 = vmax.f32 %v349, %v351
    %v354 = vperm.slane %v327, 0
    %356 = vmatpush.msra.mxu0 %v325
    %357 = vmatpush.msra.mxu0 %v324
    %358 = vmatpush.msra.mxu0 %v323
    %359 = vmatpush.msra.mxu0 %v322
    %360 = vmatpush.msra.mxu0 %v321
    %361 = vmatpush.msra.mxu0 %v320
    %362 = vmatpush.msra.mxu0 %v319
    %363 = vmatpush.msra.mxu0 %v318
    %364 = vmatpush.msra.mxu0 %v317
    %365 = vmatpush.msra.mxu0 %v316
    %366 = vmatpush.msra.mxu0 %v315
    %367 = vmatpush.msra.mxu0 %v314
    %368 = vmatpush.msra.mxu0 %v313
    %369 = vmatpush.msra.mxu0 %v312
    %370 = vmatpush.msra.mxu0 %v311
    %371 = vmatpush.msra.mxu0 %v310
    %372 = vmatmul.f32.gmra.mxu0 %v352
    %v373 = vpop.f32.mrf.mxu0
    %v374 = vadd.f32 %v354, %v373
    %375 = vdwg.mxu0
    %v376 = vld [vmem:[#allocation11] sm:$0xff]
    %v377 = vld [vmem:[#allocation11 + $0x8] sm:$0xff]
    %v378 = vld [vmem:[#allocation11 + $0x10] sm:$0xff]
    %v379 = vld [vmem:[#allocation11 + $0x18] sm:$0xff]
    %v380 = vld [vmem:[#allocation11 + $0x20] sm:$0xff]
    %v381 = vld [vmem:[#allocation11 + $0x28] sm:$0xff]
    %v382 = vld [vmem:[#allocation11 + $0x30] sm:$0xff]
    %v383 = vld [vmem:[#allocation11 + $0x38] sm:$0xff]
    %v384 = vld [vmem:[#allocation11 + $0x40] sm:$0xff]
    %v385 = vld [vmem:[#allocation11 + $0x48] sm:$0xff]
    %v386 = vld [vmem:[#allocation11 + $0x50] sm:$0xff]
    %v387 = vld [vmem:[#allocation11 + $0x58] sm:$0xff]
    %v388 = vld [vmem:[#allocation11 + $0x60] sm:$0xff]
    %v389 = vld [vmem:[#allocation11 + $0x68] sm:$0xff]
    %v390 = vld [vmem:[#allocation11 + $0x70] sm:$0xff]
    %v391 = vld [vmem:[#allocation11 + $0x78] sm:$0xff]
    %v392 = vld [vmem:[%s7] sm:$0x1]
    %v394 = vperm.slane %v392, 0
    %396 = vmatpush.msra.mxu0 %v391
    %397 = vmatpush.msra.mxu0 %v390
    %398 = vmatpush.msra.mxu0 %v389
    %399 = vmatpush.msra.mxu0 %v388
    %400 = vmatpush.msra.mxu0 %v387
    %401 = vmatpush.msra.mxu0 %v386
    %402 = vmatpush.msra.mxu0 %v385
    %403 = vmatpush.msra.mxu0 %v384
    %404 = vmatpush.msra.mxu0 %v383
    %405 = vmatpush.msra.mxu0 %v382
    %406 = vmatpush.msra.mxu0 %v381
    %407 = vmatpush.msra.mxu0 %v380
    %408 = vmatpush.msra.mxu0 %v379
    %409 = vmatpush.msra.mxu0 %v378
    %410 = vmatpush.msra.mxu0 %v377
    %411 = vmatpush.msra.mxu0 %v376
    %412 = vmatmul.f32.gmra.mxu0 %v374
    %v413 = vpop.f32.mrf.mxu0
    %v414 = vadd.f32 %v394, %v413
    %415 = vdwg.mxu0
    %416 = vst [vmem:[#allocation13] sm:$0xff] %v414
    // Predicated region
    $region58: #{tpu_custom_call.1} parent=1 // pred_check
      _
    $region59: #{tpu_custom_call.1} parent=1 // pred_check_branch
      %418 = sbr.rel (0) target = $region61
    $region60: #{tpu_custom_call.1} parent=1 // pred_region
      %420 = vsyncadd [#allocation4], 0
      %s422 = sshll.u32 [#allocation13], 4
      %s423 = int_to_ptr.vmem [resolvable:$true] %s422
      %s424 = sshll.u32 %s8, 4
      %s425 = int_to_ptr.hbm [resolvable:$true] %s424
      %427 = dma.vmem_to_hbm [thread:$0]  %s423, 128, %s425, [#allocation4]
    $region61: #{tpu_custom_call.1} parent=1 // pred_fallthru
      _
    // Predicated region
    $region62: #{tpu_custom_call.1} parent=1 // pred_check
      _
    $region63: #{tpu_custom_call.1} parent=1 // pred_check_branch
      %429 = sbr.rel (0) target = $region65
    $region64: #{tpu_custom_call.1} parent=1 // pred_region
      %431 = dma.done [#allocation4], 128
    $region65: #{tpu_custom_call.1} parent=1 // pred_fallthru
      _
    %432 = vsyncpa [#allocation3], 1
    %433 = vsyncpa [#allocation6], 1
    %434 = vsyncpa [#allocation9], 1
    %435 = vsyncpa [#allocation12], 1
    %436 = vsyncpa [#allocation4], 1

// kernel: tpu_custom_call.1
$region0: #{tpu_custom_call.1}
  #allocation0 [shape = 'u32[]', space=smem, size = 0x4, offset = 0x4, fixed_abs, tag = 'smem constant byte address 0x4 - core index']
  #allocation1 [shape = 'u32[72,128]{1,0:T(1,128)}', space=vmem, size = 0x9000, scoped, tag = 'internal scratch']
  %s0 = inlined_call_operand.hbm [shape: f32[8,128], index: 0, kind: input, shape index: {}]
  %s1 = inlined_call_operand.hbm [shape: f32[128,128], index: 1, kind: input, shape index: {}]
  %s2 = inlined_call_operand.hbm [shape: f32[2,128,128], index: 2, kind: input, shape index: {}]
  %s3 = inlined_call_operand.hbm [shape: f32[3,1,128], index: 3, kind: input, shape index: {}]
  %s4 = inlined_call_operand.hbm [shape: f32[3,128,128], index: 4, kind: input, shape index: {}]
  %s5 = inlined_call_operand.vmem [shape: f32[3,1,128], index: 5, kind: input, shape index: {}]
  %s6 = inlined_call_operand.hbm [shape: f32[128,128], index: 6, kind: input, shape index: {}]
  %s7 = inlined_call_operand.vmem [shape: f32[1,128], index: 7, kind: input, shape index: {}]
  %s8 = inlined_call_operand.hbm [shape: f32[8,128], index: 8, kind: output, shape index: {}]
  %s9 = sld [smem:[#allocation0]]
  $region66: #{tpu_custom_call.1} parent=0
    _
  %s11 = ssub.s32 1, %s9
  %s12 = scalar_select 0, %s11, %s9
  $region1: #{tpu_custom_call.1} parent=0
    #allocation2 [shape = 'u8[4096]{0}', space=vmem, size = 0x1000, scoped, tag = 'input window, operand 0, single buffered']
    #allocation3 [shape = 's32[1]{0}', space=sflag, size = 0x4, scoped, tag = 'scoped memory for tpu_custom_call.1']
    #allocation4 [shape = 's32[1]{0}', space=sflag, size = 0x4, scoped, tag = 'scoped memory for tpu_custom_call.1']
    #allocation5 [shape = 'u8[65536]{0}', space=vmem, size = 0x10000, scoped, tag = 'input window, operand 1, single buffered']
    #allocation6 [shape = 's32[1]{0}', space=sflag, size = 0x4, scoped, tag = 'scoped memory for tpu_custom_call.1']
    #allocation7 [shape = 'u8[131072]{0}', space=vmem, size = 0x20000, scoped, tag = 'input window, operand 2, single buffered']
    #allocation8 [shape = 'u8[1536]{0}', space=vmem, size = 0x800, scoped, tag = 'input window, operand 3, single buffered']
    #allocation9 [shape = 's32[1]{0}', space=sflag, size = 0x4, scoped, tag = 'scoped memory for tpu_custom_call.1']
    #allocation10 [shape = 'u8[196608]{0}', space=vmem, size = 0x30000, scoped, tag = 'input window, operand 4, single buffered']
    #allocation11 [shape = 'u8[65536]{0}', space=vmem, size = 0x10000, scoped, tag = 'input window, operand 6, single buffered']
    #allocation12 [shape = 's32[1]{0}', space=sflag, size = 0x4, scoped, tag = 'scoped memory for tpu_custom_call.1']
    #allocation13 [shape = 'u8[4096]{0}', space=vmem, size = 0x1000, scoped, tag = 'output window, operand 0, single buffered']
    %13 = vsyncpa [#allocation3], 0
    %14 = vsyncpa [#allocation6], 0
    %15 = vsyncpa [#allocation9], 0
    %16 = vsyncpa [#allocation12], 0
    %17 = vsyncpa [#allocation4], 0
    // Predicated region
    $region2: #{tpu_custom_call.1} parent=1 // pred_check
      _
    $region3: #{tpu_custom_call.1} parent=1 // pred_check_branch
      %19 = sbr.rel (0) target = $region5
    $region4: #{tpu_custom_call.1} parent=1 // pred_region
      %21 = vsyncadd [#allocation3], 0
      %s23 = sshll.u32 %s0, 4
      %s24 = int_to_ptr.hbm [resolvable:$true] %s23
      %s25 = sshll.u32 [#allocation2], 4
      %s26 = int_to_ptr.vmem [resolvable:$true] %s25
      %28 = dma.hbm_to_vmem [thread:$0]  %s24, 128, %s26, [#allocation3]
    $region5: #{tpu_custom_call.1} parent=1 // pred_fallthru
      _
    // Predicated region
    $region6: #{tpu_custom_call.1} parent=1 // pred_check
      _
    $region7: #{tpu_custom_call.1} parent=1 // pred_check_branch
      %30 = sbr.rel (0) target = $region9
    $region8: #{tpu_custom_call.1} parent=1 // pred_region
      %32 = vsyncadd [#allocation6], 0
      %s33 = sshll.u32 %s1, 4
      %s34 = int_to_ptr.hbm [resolvable:$true] %s33
      %s35 = sshll.u32 [#allocation5], 4
      %s36 = int_to_ptr.vmem [resolvable:$true] %s35
      %41 = dma.hbm_to_vmem [thread:$0]  %s34, 2048, %s36, [#allocation6], 128, 128, 8
    $region9: #{tpu_custom_call.1} parent=1 // pred_fallthru
      _
    // Predicated region
    $region10: #{tpu_custom_call.1} parent=1 // pred_check
      _
    $region11: #{tpu_custom_call.1} parent=1 // pred_check_branch
      %43 = sbr.rel (0) target = $region13
    $region12: #{tpu_custom_call.1} parent=1 // pred_region
      %45 = vsyncadd [#allocation6], 0
      %s46 = sshll.u32 %s2, 4
      %s47 = int_to_ptr.hbm [resolvable:$true] %s46
      %s48 = sshll.u32 [#allocation7], 4
      %s49 = int_to_ptr.vmem [resolvable:$true] %s48
      %54 = dma.hbm_to_vmem [thread:$0]  %s47, 4096, %s49, [#allocation6], 128, 128, 8
    $region13: #{tpu_custom_call.1} parent=1 // pred_fallthru
      _
    // Predicated region
    $region14: #{tpu_custom_call.1} parent=1 // pred_check
      _
    $region15: #{tpu_custom_call.1} parent=1 // pred_check_branch
      %56 = sbr.rel (0) target = $region17
    $region16: #{tpu_custom_call.1} parent=1 // pred_region
      %58 = vsyncadd [#allocation9], 0
      %s59 = sshll.u32 %s3, 4
      %s60 = int_to_ptr.hbm [resolvable:$true] %s59
      %s61 = sshll.u32 [#allocation8], 4
      %s62 = int_to_ptr.vmem [resolvable:$true] %s61
      %67 = dma.hbm_to_vmem [thread:$0]  %s60, 48, %s62, [#allocation9], 16, 16, 1
    $region17: #{tpu_custom_call.1} parent=1 // pred_fallthru
      _
    // Predicated region
    $region18: #{tpu_custom_call.1} parent=1 // pred_check
      _
    $region19: #{tpu_custom_call.1} parent=1 // pred_check_branch
      %69 = sbr.rel (0) target = $region21
    $region20: #{tpu_custom_call.1} parent=1 // pred_region
      %71 = vsyncadd [#allocation9], 0
      %s72 = sshll.u32 %s4, 4
      %s73 = int_to_ptr.hbm [resolvable:$true] %s72
      %s74 = sshll.u32 [#allocation10], 4
      %s75 = int_to_ptr.vmem [resolvable:$true] %s74
      %80 = dma.hbm_to_vmem [thread:$0]  %s73, 6144, %s75, [#allocation9], 128, 128, 8
    $region21: #{tpu_custom_call.1} parent=1 // pred_fallthru
      _
    // Predicated region
    $region22: #{tpu_custom_call.1} parent=1 // pred_check
      _
    $region23: #{tpu_custom_call.1} parent=1 // pred_check_branch
      %82 = sbr.rel (0) target = $region25
    $region24: #{tpu_custom_call.1} parent=1 // pred_region
      _
    $region25: #{tpu_custom_call.1} parent=1 // pred_fallthru
      _
    // Predicated region
    $region26: #{tpu_custom_call.1} parent=1 // pred_check
      _
    $region27: #{tpu_custom_call.1} parent=1 // pred_check_branch
      %84 = sbr.rel (0) target = $region29
    $region28: #{tpu_custom_call.1} parent=1 // pred_region
      %86 = vsyncadd [#allocation12], 0
      %s87 = sshll.u32 %s6, 4
      %s88 = int_to_ptr.hbm [resolvable:$true] %s87
      %s89 = sshll.u32 [#allocation11], 4
      %s90 = int_to_ptr.vmem [resolvable:$true] %s89
      %95 = dma.hbm_to_vmem [thread:$0]  %s88, 2048, %s90, [#allocation12], 128, 128, 8
    $region29: #{tpu_custom_call.1} parent=1 // pred_fallthru
      _
    // Predicated region
    $region30: #{tpu_custom_call.1} parent=1 // pred_check
      _
    $region31: #{tpu_custom_call.1} parent=1 // pred_check_branch
      %97 = sbr.rel (0) target = $region33
    $region32: #{tpu_custom_call.1} parent=1 // pred_region
      _
    $region33: #{tpu_custom_call.1} parent=1 // pred_fallthru
      _
    // Predicated region
    $region34: #{tpu_custom_call.1} parent=1 // pred_check
      _
    $region35: #{tpu_custom_call.1} parent=1 // pred_check_branch
      %99 = sbr.rel (0) target = $region37
    $region36: #{tpu_custom_call.1} parent=1 // pred_region
      %101 = dma.done [#allocation3], 128
    $region37: #{tpu_custom_call.1} parent=1 // pred_fallthru
      _
    // Predicated region
    $region38: #{tpu_custom_call.1} parent=1 // pred_check
      _
    $region39: #{tpu_custom_call.1} parent=1 // pred_check_branch
      %103 = sbr.rel (0) target = $region41
    $region40: #{tpu_custom_call.1} parent=1 // pred_region
      %105 = dma.done [#allocation6], 2048
    $region41: #{tpu_custom_call.1} parent=1 // pred_fallthru
      _
    // Predicated region
    $region42: #{tpu_custom_call.1} parent=1 // pred_check
      _
    $region43: #{tpu_custom_call.1} parent=1 // pred_check_branch
      %107 = sbr.rel (0) target = $region45
    $region44: #{tpu_custom_call.1} parent=1 // pred_region
      %109 = dma.done [#allocation6], 4096
    $region45: #{tpu_custom_call.1} parent=1 // pred_fallthru
      _
    // Predicated region
    $region46: #{tpu_custom_call.1} parent=1 // pred_check
      _
    $region47: #{tpu_custom_call.1} parent=1 // pred_check_branch
      %111 = sbr.rel (0) target = $region49
    $region48: #{tpu_custom_call.1} parent=1 // pred_region
      %113 = dma.done [#allocation9], 48
    $region49: #{tpu_custom_call.1} parent=1 // pred_fallthru
      _
    // Predicated region
    $region50: #{tpu_custom_call.1} parent=1 // pred_check
      _
    $region51: #{tpu_custom_call.1} parent=1 // pred_check_branch
      %115 = sbr.rel (0) target = $region53
    $region52: #{tpu_custom_call.1} parent=1 // pred_region
      %117 = dma.done [#allocation9], 6144
    $region53: #{tpu_custom_call.1} parent=1 // pred_fallthru
      _
    // Predicated region
    $region54: #{tpu_custom_call.1} parent=1 // pred_check
      _
    $region55: #{tpu_custom_call.1} parent=1 // pred_check_branch
      %119 = sbr.rel (0) target = $region57
    $region56: #{tpu_custom_call.1} parent=1 // pred_region
      %121 = dma.done [#allocation12], 2048
    $region57: #{tpu_custom_call.1} parent=1 // pred_fallthru
      _
    %v122 = vld [vmem:[#allocation2] sm:$0xff]
    %v123 = vld [vmem:[#allocation5] sm:$0xff]
    %v124 = vld [vmem:[#allocation5 + $0x8] sm:$0xff]
    %v125 = vld [vmem:[#allocation5 + $0x10] sm:$0xff]
    %v126 = vld [vmem:[#allocation5 + $0x18] sm:$0xff]
    %v127 = vld [vmem:[#allocation5 + $0x20] sm:$0xff]
    %v128 = vld [vmem:[#allocation5 + $0x28] sm:$0xff]
    %v129 = vld [vmem:[#allocation5 + $0x30] sm:$0xff]
    %v130 = vld [vmem:[#allocation5 + $0x38] sm:$0xff]
    %v131 = vld [vmem:[#allocation5 + $0x40] sm:$0xff]
    %v132 = vld [vmem:[#allocation5 + $0x48] sm:$0xff]
    %v133 = vld [vmem:[#allocation5 + $0x50] sm:$0xff]
    %v134 = vld [vmem:[#allocation5 + $0x58] sm:$0xff]
    %v135 = vld [vmem:[#allocation5 + $0x60] sm:$0xff]
    %v136 = vld [vmem:[#allocation5 + $0x68] sm:$0xff]
    %v137 = vld [vmem:[#allocation5 + $0x70] sm:$0xff]
    %v138 = vld [vmem:[#allocation5 + $0x78] sm:$0xff]
    %v139 = vld [vmem:[#allocation8] sm:$0x1]
    %v140 = vld [vmem:[#allocation10] sm:$0xff]
    %v141 = vld [vmem:[#allocation10 + $0x8] sm:$0xff]
    %v142 = vld [vmem:[#allocation10 + $0x10] sm:$0xff]
    %v143 = vld [vmem:[#allocation10 + $0x18] sm:$0xff]
    %v144 = vld [vmem:[#allocation10 + $0x20] sm:$0xff]
    %v145 = vld [vmem:[#allocation10 + $0x28] sm:$0xff]
    %v146 = vld [vmem:[#allocation10 + $0x30] sm:$0xff]
    %v147 = vld [vmem:[#allocation10 + $0x38] sm:$0xff]
    %v148 = vld [vmem:[#allocation10 + $0x40] sm:$0xff]
    %v149 = vld [vmem:[#allocation10 + $0x48] sm:$0xff]
    %v150 = vld [vmem:[#allocation10 + $0x50] sm:$0xff]
    %v151 = vld [vmem:[#allocation10 + $0x58] sm:$0xff]
    %v152 = vld [vmem:[#allocation10 + $0x60] sm:$0xff]
    %v153 = vld [vmem:[#allocation10 + $0x68] sm:$0xff]
    %v154 = vld [vmem:[#allocation10 + $0x70] sm:$0xff]
    %v155 = vld [vmem:[#allocation10 + $0x78] sm:$0xff]
    %v156 = vld [vmem:[%s5] sm:$0x1]
    %v158 = vperm.slane %v139, 0
    %160 = vmatpush.msra.mxu0 %v138
    %161 = vmatpush.msra.mxu0 %v137
    %162 = vmatpush.msra.mxu0 %v136
    %163 = vmatpush.msra.mxu0 %v135
    %164 = vmatpush.msra.mxu0 %v134
    %165 = vmatpush.msra.mxu0 %v133
    %166 = vmatpush.msra.mxu0 %v132
    %167 = vmatpush.msra.mxu0 %v131
    %168 = vmatpush.msra.mxu0 %v130
    %169 = vmatpush.msra.mxu0 %v129
    %170 = vmatpush.msra.mxu0 %v128
    %171 = vmatpush.msra.mxu0 %v127
    %172 = vmatpush.msra.mxu0 %v126
    %173 = vmatpush.msra.mxu0 %v125
    %174 = vmatpush.msra.mxu0 %v124
    %175 = vmatpush.msra.mxu0 %v123
    %176 = vmatmul.f32.gmra.mxu0 %v122
    %v177 = vpop.f32.mrf.mxu0
    %v178 = vadd.f32 %v158, %v177
    %179 = vdwg.mxu0
    %v180 = vmul.f32 %v178, 0.01
    %v181 = vmax.f32 %v178, %v180
    %v183 = vperm.slane %v156, 0
    %185 = vmatpush.msra.mxu0 %v155
    %186 = vmatpush.msra.mxu0 %v154
    %187 = vmatpush.msra.mxu0 %v153
    %188 = vmatpush.msra.mxu0 %v152
    %189 = vmatpush.msra.mxu0 %v151
    %190 = vmatpush.msra.mxu0 %v150
    %191 = vmatpush.msra.mxu0 %v149
    %192 = vmatpush.msra.mxu0 %v148
    %193 = vmatpush.msra.mxu0 %v147
    %194 = vmatpush.msra.mxu0 %v146
    %195 = vmatpush.msra.mxu0 %v145
    %196 = vmatpush.msra.mxu0 %v144
    %197 = vmatpush.msra.mxu0 %v143
    %198 = vmatpush.msra.mxu0 %v142
    %199 = vmatpush.msra.mxu0 %v141
    %200 = vmatpush.msra.mxu0 %v140
    %201 = vmatmul.f32.gmra.mxu0 %v181
    %v202 = vpop.f32.mrf.mxu0
    %v203 = vadd.f32 %v183, %v202
    %204 = vdwg.mxu0
    %v205 = vld [vmem:[#allocation7] sm:$0xff]
    %v206 = vld [vmem:[#allocation7 + $0x8] sm:$0xff]
    %v207 = vld [vmem:[#allocation7 + $0x10] sm:$0xff]
    %v208 = vld [vmem:[#allocation7 + $0x18] sm:$0xff]
    %v209 = vld [vmem:[#allocation7 + $0x20] sm:$0xff]
    %v210 = vld [vmem:[#allocation7 + $0x28] sm:$0xff]
    %v211 = vld [vmem:[#allocation7 + $0x30] sm:$0xff]
    %v212 = vld [vmem:[#allocation7 + $0x38] sm:$0xff]
    %v213 = vld [vmem:[#allocation7 + $0x40] sm:$0xff]
    %v214 = vld [vmem:[#allocation7 + $0x48] sm:$0xff]
    %v215 = vld [vmem:[#allocation7 + $0x50] sm:$0xff]
    %v216 = vld [vmem:[#allocation7 + $0x58] sm:$0xff]
    %v217 = vld [vmem:[#allocation7 + $0x60] sm:$0xff]
    %v218 = vld [vmem:[#allocation7 + $0x68] sm:$0xff]
    %v219 = vld [vmem:[#allocation7 + $0x70] sm:$0xff]
    %v220 = vld [vmem:[#allocation7 + $0x78] sm:$0xff]
    %s221 = scalar_lea.vmem [#allocation8], 1
    %v222 = vld [vmem:[%s221] sm:$0x1]
    %s223 = scalar_lea.vmem [#allocation10], 128
    %v224 = vld [vmem:[%s223] sm:$0xff]
    %v225 = vld [vmem:[%s223 + $0x8] sm:$0xff]
    %v226 = vld [vmem:[%s223 + $0x10] sm:$0xff]
    %v227 = vld [vmem:[%s223 + $0x18] sm:$0xff]
    %v228 = vld [vmem:[%s223 + $0x20] sm:$0xff]
    %v229 = vld [vmem:[%s223 + $0x28] sm:$0xff]
    %v230 = vld [vmem:[%s223 + $0x30] sm:$0xff]
    %v231 = vld [vmem:[%s223 + $0x38] sm:$0xff]
    %v232 = vld [vmem:[%s223 + $0x40] sm:$0xff]
    %v233 = vld [vmem:[%s223 + $0x48] sm:$0xff]
    %v234 = vld [vmem:[%s223 + $0x50] sm:$0xff]
    %v235 = vld [vmem:[%s223 + $0x58] sm:$0xff]
    %v236 = vld [vmem:[%s223 + $0x60] sm:$0xff]
    %v237 = vld [vmem:[%s223 + $0x68] sm:$0xff]
    %v238 = vld [vmem:[%s223 + $0x70] sm:$0xff]
    %v239 = vld [vmem:[%s223 + $0x78] sm:$0xff]
    %s240 = scalar_lea.vmem %s5, 1
    %v241 = vld [vmem:[%s240] sm:$0x1]
    %v243 = vperm.slane %v222, 0
    %245 = vmatpush.msra.mxu0 %v220
    %246 = vmatpush.msra.mxu0 %v219
    %247 = vmatpush.msra.mxu0 %v218
    %248 = vmatpush.msra.mxu0 %v217
    %249 = vmatpush.msra.mxu0 %v216
    %250 = vmatpush.msra.mxu0 %v215
    %251 = vmatpush.msra.mxu0 %v214
    %252 = vmatpush.msra.mxu0 %v213
    %253 = vmatpush.msra.mxu0 %v212
    %254 = vmatpush.msra.mxu0 %v211
    %255 = vmatpush.msra.mxu0 %v210
    %256 = vmatpush.msra.mxu0 %v209
    %257 = vmatpush.msra.mxu0 %v208
    %258 = vmatpush.msra.mxu0 %v207
    %259 = vmatpush.msra.mxu0 %v206
    %260 = vmatpush.msra.mxu0 %v205
    %261 = vmatmul.f32.gmra.mxu0 %v203
    %v262 = vpop.f32.mrf.mxu0
    %v263 = vadd.f32 %v243, %v262
    %264 = vdwg.mxu0
    %v265 = vmul.f32 %v263, 0.01
    %v266 = vmax.f32 %v263, %v265
    %v268 = vperm.slane %v241, 0
    %270 = vmatpush.msra.mxu0 %v239
    %271 = vmatpush.msra.mxu0 %v238
    %272 = vmatpush.msra.mxu0 %v237
    %273 = vmatpush.msra.mxu0 %v236
    %274 = vmatpush.msra.mxu0 %v235
    %275 = vmatpush.msra.mxu0 %v234
    %276 = vmatpush.msra.mxu0 %v233
    %277 = vmatpush.msra.mxu0 %v232
    %278 = vmatpush.msra.mxu0 %v231
    %279 = vmatpush.msra.mxu0 %v230
    %280 = vmatpush.msra.mxu0 %v229
    %281 = vmatpush.msra.mxu0 %v228
    %282 = vmatpush.msra.mxu0 %v227
    %283 = vmatpush.msra.mxu0 %v226
    %284 = vmatpush.msra.mxu0 %v225
    %285 = vmatpush.msra.mxu0 %v224
    %286 = vmatmul.f32.gmra.mxu0 %v266
    %v287 = vpop.f32.mrf.mxu0
    %v288 = vadd.f32 %v268, %v287
    %289 = vdwg.mxu0
    %s290 = scalar_lea.vmem [#allocation7], 128
    %v291 = vld [vmem:[%s290] sm:$0xff]
    %v292 = vld [vmem:[%s290 + $0x8] sm:$0xff]
    %v293 = vld [vmem:[%s290 + $0x10] sm:$0xff]
    %v294 = vld [vmem:[%s290 + $0x18] sm:$0xff]
    %v295 = vld [vmem:[%s290 + $0x20] sm:$0xff]
    %v296 = vld [vmem:[%s290 + $0x28] sm:$0xff]
    %v297 = vld [vmem:[%s290 + $0x30] sm:$0xff]
    %v298 = vld [vmem:[%s290 + $0x38] sm:$0xff]
    %v299 = vld [vmem:[%s290 + $0x40] sm:$0xff]
    %v300 = vld [vmem:[%s290 + $0x48] sm:$0xff]
    %v301 = vld [vmem:[%s290 + $0x50] sm:$0xff]
    %v302 = vld [vmem:[%s290 + $0x58] sm:$0xff]
    %v303 = vld [vmem:[%s290 + $0x60] sm:$0xff]
    %v304 = vld [vmem:[%s290 + $0x68] sm:$0xff]
    %v305 = vld [vmem:[%s290 + $0x70] sm:$0xff]
    %v306 = vld [vmem:[%s290 + $0x78] sm:$0xff]
    %s307 = scalar_lea.vmem [#allocation8], 2
    %v308 = vld [vmem:[%s307] sm:$0x1]
    %s309 = scalar_lea.vmem [#allocation10], 256
    %v310 = vld [vmem:[%s309] sm:$0xff]
    %v311 = vld [vmem:[%s309 + $0x8] sm:$0xff]
    %v312 = vld [vmem:[%s309 + $0x10] sm:$0xff]
    %v313 = vld [vmem:[%s309 + $0x18] sm:$0xff]
    %v314 = vld [vmem:[%s309 + $0x20] sm:$0xff]
    %v315 = vld [vmem:[%s309 + $0x28] sm:$0xff]
    %v316 = vld [vmem:[%s309 + $0x30] sm:$0xff]
    %v317 = vld [vmem:[%s309 + $0x38] sm:$0xff]
    %v318 = vld [vmem:[%s309 + $0x40] sm:$0xff]
    %v319 = vld [vmem:[%s309 + $0x48] sm:$0xff]
    %v320 = vld [vmem:[%s309 + $0x50] sm:$0xff]
    %v321 = vld [vmem:[%s309 + $0x58] sm:$0xff]
    %v322 = vld [vmem:[%s309 + $0x60] sm:$0xff]
    %v323 = vld [vmem:[%s309 + $0x68] sm:$0xff]
    %v324 = vld [vmem:[%s309 + $0x70] sm:$0xff]
    %v325 = vld [vmem:[%s309 + $0x78] sm:$0xff]
    %s326 = scalar_lea.vmem %s5, 2
    %v327 = vld [vmem:[%s326] sm:$0x1]
    %v329 = vperm.slane %v308, 0
    %331 = vmatpush.msra.mxu0 %v306
    %332 = vmatpush.msra.mxu0 %v305
    %333 = vmatpush.msra.mxu0 %v304
    %334 = vmatpush.msra.mxu0 %v303
    %335 = vmatpush.msra.mxu0 %v302
    %336 = vmatpush.msra.mxu0 %v301
    %337 = vmatpush.msra.mxu0 %v300
    %338 = vmatpush.msra.mxu0 %v299
    %339 = vmatpush.msra.mxu0 %v298
    %340 = vmatpush.msra.mxu0 %v297
    %341 = vmatpush.msra.mxu0 %v296
    %342 = vmatpush.msra.mxu0 %v295
    %343 = vmatpush.msra.mxu0 %v294
    %344 = vmatpush.msra.mxu0 %v293
    %345 = vmatpush.msra.mxu0 %v292
    %346 = vmatpush.msra.mxu0 %v291
    %347 = vmatmul.f32.gmra.mxu0 %v288
    %v348 = vpop.f32.mrf.mxu0
    %v349 = vadd.f32 %v329, %v348
    %350 = vdwg.mxu0
    %v351 = vmul.f32 %v349, 0.01
    %v352 = vmax.f32 %v349, %v351
    %v354 = vperm.slane %v327, 0
    %356 = vmatpush.msra.mxu0 %v325
    %357 = vmatpush.msra.mxu0 %v324
    %358 = vmatpush.msra.mxu0 %v323
    %359 = vmatpush.msra.mxu0 %v322
    %360 = vmatpush.msra.mxu0 %v321
    %361 = vmatpush.msra.mxu0 %v320
    %362 = vmatpush.msra.mxu0 %v319
    %363 = vmatpush.msra.mxu0 %v318
    %364 = vmatpush.msra.mxu0 %v317
    %365 = vmatpush.msra.mxu0 %v316
    %366 = vmatpush.msra.mxu0 %v315
    %367 = vmatpush.msra.mxu0 %v314
    %368 = vmatpush.msra.mxu0 %v313
    %369 = vmatpush.msra.mxu0 %v312
    %370 = vmatpush.msra.mxu0 %v311
    %371 = vmatpush.msra.mxu0 %v310
    %372 = vmatmul.f32.gmra.mxu0 %v352
    %v373 = vpop.f32.mrf.mxu0
    %v374 = vadd.f32 %v354, %v373
    %375 = vdwg.mxu0
    %v376 = vld [vmem:[#allocation11] sm:$0xff]
    %v377 = vld [vmem:[#allocation11 + $0x8] sm:$0xff]
    %v378 = vld [vmem:[#allocation11 + $0x10] sm:$0xff]
    %v379 = vld [vmem:[#allocation11 + $0x18] sm:$0xff]
    %v380 = vld [vmem:[#allocation11 + $0x20] sm:$0xff]
    %v381 = vld [vmem:[#allocation11 + $0x28] sm:$0xff]
    %v382 = vld [vmem:[#allocation11 + $0x30] sm:$0xff]
    %v383 = vld [vmem:[#allocation11 + $0x38] sm:$0xff]
    %v384 = vld [vmem:[#allocation11 + $0x40] sm:$0xff]
    %v385 = vld [vmem:[#allocation11 + $0x48] sm:$0xff]
    %v386 = vld [vmem:[#allocation11 + $0x50] sm:$0xff]
    %v387 = vld [vmem:[#allocation11 + $0x58] sm:$0xff]
    %v388 = vld [vmem:[#allocation11 + $0x60] sm:$0xff]
    %v389 = vld [vmem:[#allocation11 + $0x68] sm:$0xff]
    %v390 = vld [vmem:[#allocation11 + $0x70] sm:$0xff]
    %v391 = vld [vmem:[#allocation11 + $0x78] sm:$0xff]
    %v392 = vld [vmem:[%s7] sm:$0x1]
    %v394 = vperm.slane %v392, 0
    %396 = vmatpush.msra.mxu0 %v391
    %397 = vmatpush.msra.mxu0 %v390
    %398 = vmatpush.msra.mxu0 %v389
    %399 = vmatpush.msra.mxu0 %v388
    %400 = vmatpush.msra.mxu0 %v387
    %401 = vmatpush.msra.mxu0 %v386
    %402 = vmatpush.msra.mxu0 %v385
    %403 = vmatpush.msra.mxu0 %v384
    %404 = vmatpush.msra.mxu0 %v383
    %405 = vmatpush.msra.mxu0 %v382
    %406 = vmatpush.msra.mxu0 %v381
    %407 = vmatpush.msra.mxu0 %v380
    %408 = vmatpush.msra.mxu0 %v379
    %409 = vmatpush.msra.mxu0 %v378
    %410 = vmatpush.msra.mxu0 %v377
    %411 = vmatpush.msra.mxu0 %v376
    %412 = vmatmul.f32.gmra.mxu0 %v374
    %v413 = vpop.f32.mrf.mxu0
    %v414 = vadd.f32 %v394, %v413
    %415 = vdwg.mxu0
    %416 = vst [vmem:[#allocation13] sm:$0xff] %v414
    // Predicated region
    $region58: #{tpu_custom_call.1} parent=1 // pred_check
      _
    $region59: #{tpu_custom_call.1} parent=1 // pred_check_branch
      %418 = sbr.rel (0) target = $region61
    $region60: #{tpu_custom_call.1} parent=1 // pred_region
      %420 = vsyncadd [#allocation4], 0
      %s422 = sshll.u32 [#allocation13], 4
      %s423 = int_to_ptr.vmem [resolvable:$true] %s422
      %s424 = sshll.u32 %s8, 4
      %s425 = int_to_ptr.hbm [resolvable:$true] %s424
      %427 = dma.vmem_to_hbm [thread:$0]  %s423, 128, %s425, [#allocation4]
    $region61: #{tpu_custom_call.1} parent=1 // pred_fallthru
      _
    // Predicated region
    $region62: #{tpu_custom_call.1} parent=1 // pred_check
      _
    $region63: #{tpu_custom_call.1} parent=1 // pred_check_branch
      %429 = sbr.rel (0) target = $region65
    $region64: #{tpu_custom_call.1} parent=1 // pred_region
      %431 = dma.done [#allocation4], 128
    $region65: #{tpu_custom_call.1} parent=1 // pred_fallthru
      _
    %432 = vsyncpa [#allocation3], 1
    %433 = vsyncpa [#allocation6], 1
    %434 = vsyncpa [#allocation9], 1
    %435 = vsyncpa [#allocation12], 1
    %436 = vsyncpa [#allocation4], 1

</llo_original>
